<compile_context>
chip_gen: v7x
topology: tpu7x:2x2x1
jax: 0.10.0
libtpu: 0.0.40
codegen_flags: <defaults>
</compile_context>

<pallas_src>
import functools

import numpy as np

import jax
import jax.numpy as jnp
from jax.experimental import pallas as pl
from jax.experimental.pallas import tpu as pltpu


def _round_up(x, m):
    return (x + m - 1) // m * m


# ----------------------------------------------------------------------------
# Init-time weight preprocessing (runs once, outside the forward path)
# ----------------------------------------------------------------------------
def _conv_to_matrix(wt, h_in, w_in, stride, pad):
    """Unroll a Conv2d weight (Cout, Cin, KH, KW) into a dense matrix T of shape
    (Cin*h_in*w_in, Cout*OH*OW) such that flat_out = flat_in @ T, where flat_*
    use PyTorch NCHW .view(B, -1) flattening order."""
    wt = np.asarray(wt, dtype=np.float32)
    cout, cin, kh, kw = wt.shape
    out_h = (h_in + 2 * pad - kh) // stride + 1
    out_w = (w_in + 2 * pad - kw) // stride + 1
    T = np.zeros((cin * h_in * w_in, cout * out_h * out_w), dtype=np.float32)
    ohs = np.arange(out_h)
    ows = np.arange(out_w)
    for i in range(kh):
        for j in range(kw):
            ihs = ohs * stride + i - pad
            iws = ows * stride + j - pad
            vh = (ihs >= 0) & (ihs < h_in)
            vw = (iws >= 0) & (iws < w_in)
            if not vh.any() or not vw.any():
                continue
            rows_sp = ihs[vh][:, None] * w_in + iws[vw][None, :]
            cols_sp = ohs[vh][:, None] * out_w + ows[vw][None, :]
            for ci in range(cin):
                for co in range(cout):
                    T[ci * h_in * w_in + rows_sp,
                      co * out_h * out_w + cols_sp] = wt[co, ci, i, j]
    return T, out_h, out_w


def _bn_affine_np(bn, eps=1e-5):
    gamma, beta, mean, var = (np.asarray(t, np.float32) for t in bn)
    scale = gamma / np.sqrt(var + eps)
    return scale, beta - mean * scale


def prepare_params(params, latent_dim=1, channels=1, in_hw=24):
    """Fold every conv into a Toeplitz matmul matrix, fold BN scale/shift, transpose FC
    weights, zero-pad every stage's N (and the next stage's K) to a 128 multiple, and
    concatenate all weights into one bf16 buffer / all shifts into one f32 row."""
    H = W = in_hw
    stages = []  # (matrix (K,N), shift (N,), leaky_slope)

    # conv1 (no BN, no bias)
    T1, H, W = _conv_to_matrix(params["w1"], H, W, stride=2, pad=1)
    stages.append((T1, np.zeros((T1.shape[1],), np.float32), 0.2))

    # conv2..conv4 with folded BatchNorm (inference-mode running stats)
    # TODO(synk): PyTorch's default training-mode batch statistics are not replicated.
    for wname, bnname, stride, pad in (("w2", "bn2", 2, 1),
                                       ("w3", "bn3", 2, 1),
                                       ("w4", "bn4", 1, 0)):
        T, H, W = _conv_to_matrix(params[wname], H, W, stride=stride, pad=pad)
        scale, shift = _bn_affine_np(params[bnname])
        ohw = H * W
        T = T * np.repeat(scale, ohw)[None, :]        # fold BN scale into columns
        stages.append((T, np.repeat(shift, ohw).astype(np.float32), 0.2))

    # fc1: Linear(32, 512) + bias; fc2: Linear(512, latent) + bias
    stages.append((np.asarray(params["fc1_w"], np.float32).T,
                   np.asarray(params["fc1_b"], np.float32), 0.01))
    stages.append((np.asarray(params["fc2_w"], np.float32).T,
                   np.asarray(params["fc2_b"], np.float32), 0.01))

    k_in = channels * in_hw * in_hw
    n_pads = [max(_round_up(T.shape[1], 128), 128) for T, _, _ in stages]
    k_pads = [k_in] + n_pads[:-1]                    # next-stage K == previous padded N

    k_max = _round_up(max(k_pads), 16)               # bf16 packs 2 rows / sublane
    n_total = sum(n_pads)
    wbuf = np.zeros((k_max, n_total), np.float32)
    sbuf = np.zeros((1, n_total), np.float32)
    layout = []
    off = 0
    for (T, shift, slope), kp, npad in zip(stages, k_pads, n_pads):
        wbuf[:T.shape[0], off:off + T.shape[1]] = T
        sbuf[0, off:off + shift.shape[0]] = shift
        layout.append((int(kp), int(off), int(npad), float(slope)))
        off += npad

    return {
        "wbuf": jnp.asarray(wbuf, jnp.bfloat16),     # single concatenated weight buffer
        "sbuf": jnp.asarray(sbuf, jnp.float32),      # single concatenated shift row
        "layout": tuple(layout),                     # static per-stage (K, off, N, slope)
        "latent_dim": latent_dim,
        "in_features": k_in,
    }


# ----------------------------------------------------------------------------
# Fused Pallas kernel: whole ConvEncoder forward, activations never leave VMEM
# ----------------------------------------------------------------------------
def _make_kernel(layout):
    """Fused forward for a static stage layout.  Each stage is one bf16 MXU matmul
    (f32 accumulate) + folded-BN/bias shift + LeakyReLU; the per-stage weight/shift
    operands are (8,128)-aligned static slices of the concatenated buffers."""
    def kernel(x_ref, w_ref, s_ref, o_ref):
        h = x_ref[...].astype(jnp.bfloat16)                      # cast-in-kernel
        last = len(layout) - 1
        for idx, (k, off, n, slope) in enumerate(layout):
            y = jnp.dot(h, w_ref[0:k, off:off + n],
                        preferred_element_type=jnp.float32)      # bf16 MXU, f32 acc
            y = y + s_ref[:, off:off + n]                        # BN shift / FC bias
            y = jnp.maximum(y, slope * y)                        # LeakyReLU (mul+max)
            if idx == last:
                o_ref[...] = y.astype(o_ref.dtype)               # lane-dense bf16 store
            else:
                h = y.astype(jnp.bfloat16)
    return kernel


@functools.partial(jax.jit, static_argnames=("latent_dim", "layout"))
def _forward_impl(wbuf, sbuf, x, *, latent_dim, layout):
    B = x.shape[0]
    k_in = layout[0][0]
    n_out = layout[-1][2]
    xf = x.reshape(B, k_in)                          # free reshape; no wrapper cast / pad

    # M tile: 256 matches v6e/v7x MXU row depth; shrink for tiny batches.
    tile_m = min(256, max(8, _round_up(B, 8)))
    grid_m = pl.cdiv(B, tile_m)
    m_out = grid_m * tile_m                          # padded rows -> unmasked full-block stores

    out = pl.pallas_call(
        _make_kernel(layout),
        out_shape=jax.ShapeDtypeStruct((m_out, n_out), jnp.bfloat16),
        grid=(grid_m,),
        in_specs=[
            pl.BlockSpec((tile_m, k_in), lambda i: (i, 0)),      # batch-tiled input
            pl.BlockSpec(wbuf.shape, lambda i: (0, 0)),          # weights: VMEM-resident
            pl.BlockSpec(sbuf.shape, lambda i: (0, 0)),          # shifts: VMEM-resident
        ],
        out_specs=pl.BlockSpec((tile_m, n_out), lambda i: (i, 0)),
        compiler_params=pltpu.CompilerParams(
            dimension_semantics=("parallel",)),                  # v7x: both TensorCores
    )(xf, wbuf, sbuf)
    # Garbage rows of a ragged last tile are discarded here (keep the [:B] slice).
    return out[:B, :latent_dim].astype(x.dtype).reshape(B, latent_dim, 1, 1)


def conv_encoder_forward(prep, x):
    return _forward_impl(prep["wbuf"], prep["sbuf"], x,
                         latent_dim=prep["latent_dim"], layout=prep["layout"])


# ----------------------------------------------------------------------------
# Parameters (deterministic synthetic init, shapes from ConvEncoder.__init__)
# ----------------------------------------------------------------------------
def init_params(key, latent_dim=1, channels=1):
    ndf = 2
    ks = jax.random.split(key, 20)

    def nrm(k, shape, s=0.1):
        return (s * jax.random.normal(k, shape)).astype(jnp.float32)

    def bn(kg, kb, km, kv, c):
        return (1.0 + 0.1 * jax.random.normal(kg, (c,)).astype(jnp.float32),
                0.1 * jax.random.normal(kb, (c,)).astype(jnp.float32),
                0.1 * jax.random.normal(km, (c,)).astype(jnp.float32),
                1.0 + 0.1 * jax.random.uniform(kv, (c,)).astype(jnp.float32))

    return {
        "w1": nrm(ks[0], (ndf, channels, 4, 4)),
        "w2": nrm(ks[1], (ndf * 2, ndf, 4, 4)),
        "w3": nrm(ks[2], (ndf * 4, ndf * 2, 4, 4)),
        "w4": nrm(ks[3], (ndf * 4, ndf * 4, 2, 2)),
        "bn2": bn(ks[4], ks[5], ks[6], ks[7], ndf * 2),
        "bn3": bn(ks[8], ks[9], ks[10], ks[11], ndf * 4),
        "bn4": bn(ks[12], ks[13], ks[14], ks[15], ndf * 4),
        "fc1_w": nrm(ks[16], (512, 32)),
        "fc1_b": nrm(ks[17], (512,)),
        "fc2_w": nrm(ks[18], (latent_dim, 512)),
        "fc2_b": nrm(ks[19], (latent_dim,)),
    }


if __name__ == "__main__":
    latent_dim, channels = 1, 1
    key = jax.random.PRNGKey(0)
    k_param, k_x1, k_x2 = jax.random.split(key, 3)

    params = init_params(k_param, latent_dim=latent_dim, channels=channels)
    prep = prepare_params(params, latent_dim=latent_dim, channels=channels, in_hw=24)

    # Input spatial size 24x24 is dictated by Linear(32, 512) in the module.
    x = jax.random.normal(k_x1, (2, channels, 24, 24), dtype=jnp.float32)
    out = jax.block_until_ready(conv_encoder_forward(prep, x))
    assert out.shape == (2, latent_dim, 1, 1), out.shape
    assert bool(jnp.isfinite(out).all())

    # Larger batch exercises the multi-step (ragged) M grid and v7x core sharding.
    xb = jax.random.normal(k_x2, (300, channels, 24, 24), dtype=jnp.float32)
    outb = jax.block_until_ready(conv_encoder_forward(prep, xb))
    assert outb.shape == (300, latent_dim, 1, 1), outb.shape
    assert bool(jnp.isfinite(outb).all())

    print("KERNEL_OK")
</pallas_src>

<mosaic_0001>
module attributes {stable_mosaic.version = 11 : i64} {
  func.func @kernel(%arg0: i32, %arg1: memref<8x576xf32, #tpu.memory_space<vmem>>, %arg2: memref<576x1536xbf16, #tpu.memory_space<vmem>>, %arg3: memref<1x1536xf32, #tpu.memory_space<vmem>>, %arg4: memref<8x128xbf16, #tpu.memory_space<vmem>>) attributes {dimension_semantics = [#tpu.dimension_semantics<parallel>], iteration_bounds = array<i64: 1>, scalar_prefetch = 0 : i64, scratch_operands = 0 : i64, tpu.core_type = #tpu.core_type<tc>, window_params = [{transform_indices = @transform_0, window_bounds = array<i64: 8, 576>}, {pipeline_mode = #tpu.pipeline_mode<synchronous>, transform_indices = @transform_1, window_bounds = array<i64: 576, 1536>}, {pipeline_mode = #tpu.pipeline_mode<synchronous>, transform_indices = @transform_2, window_bounds = array<i64: 1, 1536>}, {transform_indices = @transform_3, window_bounds = array<i64: 8, 128>}]} {
    %c0 = arith.constant 0 : index
    %c0_0 = arith.constant 0 : index
    %0 = vector.load %arg1[%c0, %c0_0] : memref<8x576xf32, #tpu.memory_space<vmem>>, vector<8x576xf32>
    %1 = arith.truncf %0 : vector<8x576xf32> to vector<8x576xbf16>
    %c0_1 = arith.constant 0 : index
    %c0_2 = arith.constant 0 : index
    %2 = vector.load %arg2[%c0_1, %c0_2] : memref<576x1536xbf16, #tpu.memory_space<vmem>>, vector<576x384xbf16>
    %cst = arith.constant dense<0.000000e+00> : vector<8x384xf32>
    %3 = tpu.matmul %1, %2, %cst {dimension_numbers = #tpu.dot_dimension_numbers<[1], [0], [0], [1], [0, 0, 1, 1], [], []>} : vector<8x576xbf16>, vector<576x384xbf16>, vector<8x384xf32> -> vector<8x384xf32>
    %c0_3 = arith.constant 0 : index
    %c0_4 = arith.constant 0 : index
    %4 = vector.load %arg3[%c0_3, %c0_4] : memref<1x1536xf32, #tpu.memory_space<vmem>>, vector<1x384xf32>
    %5 = vector.broadcast %4 : vector<1x384xf32> to vector<8x384xf32>
    %6 = arith.addf %3, %5 : vector<8x384xf32>
    %cst_5 = arith.constant 2.000000e-01 : f32
    %7 = vector.broadcast %cst_5 : f32 to vector<8x384xf32>
    %8 = arith.mulf %7, %6 : vector<8x384xf32>
    %9 = arith.maximumf %6, %8 : vector<8x384xf32>
    %10 = arith.truncf %9 : vector<8x384xf32> to vector<8x384xbf16>
    %c0_6 = arith.constant 0 : index
    %c384 = arith.constant 384 : index
    %11 = vector.load %arg2[%c0_6, %c384] : memref<576x1536xbf16, #tpu.memory_space<vmem>>, vector<384x256xbf16>
    %cst_7 = arith.constant dense<0.000000e+00> : vector<8x256xf32>
    %12 = tpu.matmul %10, %11, %cst_7 {dimension_numbers = #tpu.dot_dimension_numbers<[1], [0], [0], [1], [0, 0, 1, 1], [], []>} : vector<8x384xbf16>, vector<384x256xbf16>, vector<8x256xf32> -> vector<8x256xf32>
    %c0_8 = arith.constant 0 : index
    %c384_9 = arith.constant 384 : index
    %13 = vector.load %arg3[%c0_8, %c384_9] : memref<1x1536xf32, #tpu.memory_space<vmem>>, vector<1x256xf32>
    %14 = vector.broadcast %13 : vector<1x256xf32> to vector<8x256xf32>
    %15 = arith.addf %12, %14 : vector<8x256xf32>
    %cst_10 = arith.constant 2.000000e-01 : f32
    %16 = vector.broadcast %cst_10 : f32 to vector<8x256xf32>
    %17 = arith.mulf %16, %15 : vector<8x256xf32>
    %18 = arith.maximumf %15, %17 : vector<8x256xf32>
    %19 = arith.truncf %18 : vector<8x256xf32> to vector<8x256xbf16>
    %c0_11 = arith.constant 0 : index
    %c640 = arith.constant 640 : index
    %20 = vector.load %arg2[%c0_11, %c640] : memref<576x1536xbf16, #tpu.memory_space<vmem>>, vector<256x128xbf16>
    %cst_12 = arith.constant dense<0.000000e+00> : vector<8x128xf32>
    %21 = tpu.matmul %19, %20, %cst_12 {dimension_numbers = #tpu.dot_dimension_numbers<[1], [0], [0], [1], [0, 0, 1, 1], [], []>} : vector<8x256xbf16>, vector<256x128xbf16>, vector<8x128xf32> -> vector<8x128xf32>
    %c0_13 = arith.constant 0 : index
    %c640_14 = arith.constant 640 : index
    %22 = vector.load %arg3[%c0_13, %c640_14] : memref<1x1536xf32, #tpu.memory_space<vmem>>, vector<1x128xf32>
    %23 = vector.broadcast %22 : vector<1x128xf32> to vector<8x128xf32>
    %24 = arith.addf %21, %23 : vector<8x128xf32>
    %cst_15 = arith.constant 2.000000e-01 : f32
    %25 = vector.broadcast %cst_15 : f32 to vector<8x128xf32>
    %26 = arith.mulf %25, %24 : vector<8x128xf32>
    %27 = arith.maximumf %24, %26 : vector<8x128xf32>
    %28 = arith.truncf %27 : vector<8x128xf32> to vector<8x128xbf16>
    %c0_16 = arith.constant 0 : index
    %c768 = arith.constant 768 : index
    %29 = vector.load %arg2[%c0_16, %c768] : memref<576x1536xbf16, #tpu.memory_space<vmem>>, vector<128x128xbf16>
    %cst_17 = arith.constant dense<0.000000e+00> : vector<8x128xf32>
    %30 = tpu.matmul %28, %29, %cst_17 {dimension_numbers = #tpu.dot_dimension_numbers<[1], [0], [0], [1], [0, 0, 1, 1], [], []>} : vector<8x128xbf16>, vector<128x128xbf16>, vector<8x128xf32> -> vector<8x128xf32>
    %c0_18 = arith.constant 0 : index
    %c768_19 = arith.constant 768 : index
    %31 = vector.load %arg3[%c0_18, %c768_19] : memref<1x1536xf32, #tpu.memory_space<vmem>>, vector<1x128xf32>
    %32 = vector.broadcast %31 : vector<1x128xf32> to vector<8x128xf32>
    %33 = arith.addf %30, %32 : vector<8x128xf32>
    %cst_20 = arith.constant 2.000000e-01 : f32
    %34 = vector.broadcast %cst_20 : f32 to vector<8x128xf32>
    %35 = arith.mulf %34, %33 : vector<8x128xf32>
    %36 = arith.maximumf %33, %35 : vector<8x128xf32>
    %37 = arith.truncf %36 : vector<8x128xf32> to vector<8x128xbf16>
    %c0_21 = arith.constant 0 : index
    %c896 = arith.constant 896 : index
    %38 = vector.load %arg2[%c0_21, %c896] : memref<576x1536xbf16, #tpu.memory_space<vmem>>, vector<128x512xbf16>
    %cst_22 = arith.constant dense<0.000000e+00> : vector<8x512xf32>
    %39 = tpu.matmul %37, %38, %cst_22 {dimension_numbers = #tpu.dot_dimension_numbers<[1], [0], [0], [1], [0, 0, 1, 1], [], []>} : vector<8x128xbf16>, vector<128x512xbf16>, vector<8x512xf32> -> vector<8x512xf32>
    %c0_23 = arith.constant 0 : index
    %c896_24 = arith.constant 896 : index
    %40 = vector.load %arg3[%c0_23, %c896_24] : memref<1x1536xf32, #tpu.memory_space<vmem>>, vector<1x512xf32>
    %41 = vector.broadcast %40 : vector<1x512xf32> to vector<8x512xf32>
    %42 = arith.addf %39, %41 : vector<8x512xf32>
    %cst_25 = arith.constant 0.00999999977 : f32
    %43 = vector.broadcast %cst_25 : f32 to vector<8x512xf32>
    %44 = arith.mulf %43, %42 : vector<8x512xf32>
    %45 = arith.maximumf %42, %44 : vector<8x512xf32>
    %46 = arith.truncf %45 : vector<8x512xf32> to vector<8x512xbf16>
    %c0_26 = arith.constant 0 : index
    %c1408 = arith.constant 1408 : index
    %47 = vector.load %arg2[%c0_26, %c1408] : memref<576x1536xbf16, #tpu.memory_space<vmem>>, vector<512x128xbf16>
    %cst_27 = arith.constant dense<0.000000e+00> : vector<8x128xf32>
    %48 = tpu.matmul %46, %47, %cst_27 {dimension_numbers = #tpu.dot_dimension_numbers<[1], [0], [0], [1], [0, 0, 1, 1], [], []>} : vector<8x512xbf16>, vector<512x128xbf16>, vector<8x128xf32> -> vector<8x128xf32>
    %c0_28 = arith.constant 0 : index
    %c1408_29 = arith.constant 1408 : index
    %49 = vector.load %arg3[%c0_28, %c1408_29] : memref<1x1536xf32, #tpu.memory_space<vmem>>, vector<1x128xf32>
    %50 = vector.broadcast %49 : vector<1x128xf32> to vector<8x128xf32>
    %51 = arith.addf %48, %50 : vector<8x128xf32>
    %cst_30 = arith.constant 0.00999999977 : f32
    %52 = vector.broadcast %cst_30 : f32 to vector<8x128xf32>
    %53 = arith.mulf %52, %51 : vector<8x128xf32>
    %54 = arith.maximumf %51, %53 : vector<8x128xf32>
    %55 = arith.truncf %54 : vector<8x128xf32> to vector<8x128xbf16>
    %c0_31 = arith.constant 0 : index
    %c0_32 = arith.constant 0 : index
    %56 = vector.load %arg4[%c0_31, %c0_32] : memref<8x128xbf16, #tpu.memory_space<vmem>>, vector<8x128xbf16>
    tpu.vector_store %arg4[%c0_31, %c0_32], %55 {strides = array<i32>} : memref<8x128xbf16, #tpu.memory_space<vmem>>, vector<8x128xbf16>,
    return
  }
  func.func @transform_0(%arg0: i32) -> (i32, i32) {
    %c0_i32 = arith.constant 0 : i32
    %c0_i32_0 = arith.constant 0 : i32
    return %arg0, %c0_i32 : i32, i32
  }
  func.func @transform_1(%arg0: i32) -> (i32, i32) {
    %c0_i32 = arith.constant 0 : i32
    %c0_i32_0 = arith.constant 0 : i32
    %c0_i32_1 = arith.constant 0 : i32
    return %c0_i32, %c0_i32_0 : i32, i32
  }
  func.func @transform_2(%arg0: i32) -> (i32, i32) {
    %c0_i32 = arith.constant 0 : i32
    %c0_i32_0 = arith.constant 0 : i32
    %c0_i32_1 = arith.constant 0 : i32
    return %c0_i32, %c0_i32_0 : i32, i32
  }
  func.func @transform_3(%arg0: i32) -> (i32, i32) {
    %c0_i32 = arith.constant 0 : i32
    %c0_i32_0 = arith.constant 0 : i32
    return %arg0, %c0_i32 : i32, i32
  }
}

</mosaic_0001>

<llo_original>
// kernel: _forward_impl.1
$region0: #{_forward_impl.1}
  #allocation0 [shape = 'u32[]', space=smem, size = 0x4, offset = 0x4, fixed_abs, tag = 'smem constant byte address 0x4 - core index']
  #allocation1 [shape = 'u32[144,128]{1,0:T(1,128)}', space=vmem, size = 0x12000, scoped, tag = 'internal scratch']
  %s0 = inlined_call_operand.vmem [shape: f32[2,576], index: 0, kind: input, shape index: {}]
  %s1 = inlined_call_operand.hbm [shape: bf16[576,1536], index: 1, kind: input, shape index: {}]
  %s2 = inlined_call_operand.hbm [shape: f32[1,1536], index: 2, kind: input, shape index: {}]
  %s3 = inlined_call_operand.vmem [shape: bf16[8,128], index: 3, kind: output, shape index: {}]
  %s4 = sld [smem:[#allocation0]]
  $region30: #{_forward_impl.1} parent=0
    _
  %s6 = ssub.s32 1, %s4
  %s7 = scalar_select 0, %s6, %s4
  $region1: #{_forward_impl.1} parent=0
    #allocation2 [shape = 'u8[1769472]{0}', space=vmem, size = 0x1b0000, scoped, tag = 'input window, operand 1, single buffered']
    #allocation3 [shape = 's32[1]{0}', space=sflag, size = 0x4, scoped, tag = 'scoped memory for _forward_impl.1']
    #allocation4 [shape = 'u8[6144]{0}', space=vmem, size = 0x1800, scoped, tag = 'input window, operand 2, single buffered']
    #allocation5 [shape = 's32[1]{0}', space=sflag, size = 0x4, scoped, tag = 'scoped memory for _forward_impl.1']
    %8 = vsyncpa [#allocation3], 0
    %9 = vsyncpa [#allocation5], 0
    // Predicated region
    $region2: #{_forward_impl.1} parent=1 // pred_check
      _
    $region3: #{_forward_impl.1} parent=1 // pred_check_branch
      %11 = sbr.rel (0) target = $region5
    $region4: #{_forward_impl.1} parent=1 // pred_region
      _
    $region5: #{_forward_impl.1} parent=1 // pred_fallthru
      _
    // Predicated region
    $region6: #{_forward_impl.1} parent=1 // pred_check
      _
    $region7: #{_forward_impl.1} parent=1 // pred_check_branch
      %13 = sbr.rel (0) target = $region9
    $region8: #{_forward_impl.1} parent=1 // pred_region
      %s15 = ssub.s32 55296, 55296
      %16 = vsyncadd [#allocation3], %s15
      %s17 = sshll.u32 [#allocation2], 4
      %s18 = int_to_ptr.vmem [resolvable:$true] %s17
      %23 = dma.hbm_to_vmem [thread:$0]  %s1, 55296, %s18, [#allocation3], 768, 768, 48
    $region9: #{_forward_impl.1} parent=1 // pred_fallthru
      _
    // Predicated region
    $region10: #{_forward_impl.1} parent=1 // pred_check
      _
    $region11: #{_forward_impl.1} parent=1 // pred_check_branch
      %25 = sbr.rel (0) target = $region13
    $region12: #{_forward_impl.1} parent=1 // pred_region
      %s27 = ssub.s32 192, 192
      %28 = vsyncadd [#allocation5], %s27
      %s30 = sshll.u32 [#allocation4], 4
      %s31 = int_to_ptr.vmem [resolvable:$true] %s30
      %33 = dma.hbm_to_vmem [thread:$0]  %s2, 192, %s31, [#allocation5]
    $region13: #{_forward_impl.1} parent=1 // pred_fallthru
      _
    // Predicated region
    $region14: #{_forward_impl.1} parent=1 // pred_check
      _
    $region15: #{_forward_impl.1} parent=1 // pred_check_branch
      %35 = sbr.rel (0) target = $region17
    $region16: #{_forward_impl.1} parent=1 // pred_region
      %36 = dma.done [#allocation3], 55296
    $region17: #{_forward_impl.1} parent=1 // pred_fallthru
      _
    // Predicated region
    $region18: #{_forward_impl.1} parent=1 // pred_check
      _
    $region19: #{_forward_impl.1} parent=1 // pred_check_branch
      %38 = sbr.rel (0) target = $region21
    $region20: #{_forward_impl.1} parent=1 // pred_region
      %39 = dma.done [#allocation5], 192
    $region21: #{_forward_impl.1} parent=1 // pred_fallthru
      _
    %v41 = vld [vmem:[%s0] sm:$0xff]
    %v42 = vld [vmem:[%s0 + $0x8] sm:$0x3]
    %v43 = vld [vmem:[%s0 + $0xa] sm:$0xff]
    %v44 = vld [vmem:[%s0 + $0x12] sm:$0x3]
    %v45 = vld [vmem:[%s0 + $0x14] sm:$0xff]
    %v46 = vld [vmem:[%s0 + $0x1c] sm:$0x3]
    %v47 = vld [vmem:[%s0 + $0x1e] sm:$0xff]
    %v48 = vld [vmem:[%s0 + $0x26] sm:$0x3]
    %v57 = vcombine.low %v41, %v43
    %v58 = vcombine.high %v41, %v43
    %v59 = vcombine.low %v45, %v47
    %v60 = vcombine.high %v45, %v47
    %v62 = vunpack.c.l.s4 1983009808
    %v63 = vunpack.c.0.s8 %v62
    %v64 = vlaneseq
    %v65 = vshrl.u32 %v64, 7
    %v66 = vsub.s32 %v63, %v65
    %v67 = vrot.slane %v57, %v66
    %v69 = vunpack.c.l.s4 1983009808
    %v70 = vunpack.c.0.s8 %v69
    %v71 = vlaneseq
    %v72 = vshrl.u32 %v71, 7
    %v73 = vsub.s32 %v70, %v72
    %v74 = vrot.slane %v58, %v73
    %v76 = vunpack.c.l.s4 1983009808
    %v77 = vunpack.c.0.s8 %v76
    %v78 = vlaneseq
    %v79 = vshrl.u32 %v78, 7
    %v80 = vsub.s32 %v77, %v79
    %v81 = vrot.slane %v59, %v80
    %v83 = vunpack.c.l.s4 1983009808
    %v84 = vunpack.c.0.s8 %v83
    %v85 = vlaneseq
    %v86 = vshrl.u32 %v85, 7
    %v87 = vsub.s32 %v84, %v86
    %v88 = vrot.slane %v60, %v87
    %v89 = vcombine.low %v67, %v81
    %v90 = vcombine.high %v67, %v81
    %v91 = vcombine.low %v74, %v88
    %v92 = vcombine.high %v74, %v88
    %v93 = vcombine.low %v42, %v44
    %v94 = vcombine.low %v46, %v48
    %v96 = vunpack.c.l.s4 1983009808
    %v97 = vunpack.c.0.s8 %v96
    %v98 = vlaneseq
    %v99 = vshrl.u32 %v98, 7
    %v100 = vsub.s32 %v97, %v99
    %v101 = vrot.slane %v93, %v100
    %v103 = vunpack.c.l.s4 1983009808
    %v104 = vunpack.c.0.s8 %v103
    %v105 = vlaneseq
    %v106 = vshrl.u32 %v105, 7
    %v107 = vsub.s32 %v104, %v106
    %v108 = vrot.slane %v94, %v107
    %v109 = vcombine.low %v101, %v108
    %v115 = vpack.c.bf16 %v89, %v89
    %v116 = vpack.c.bf16 %v90, %v90
    %v117 = vpack.c.bf16 %v91, %v91
    %v118 = vpack.c.bf16 %v92, %v92
    %v119 = vpack.c.bf16 %v109, %v109
    %v120 = vld [vmem:[#allocation2] sm:$0xff]
    %v121 = vld [vmem:[#allocation2 + $0x8] sm:$0xf]
    %v122 = vld [vmem:[#allocation2 + $0x30] sm:$0xff]
    %v123 = vld [vmem:[#allocation2 + $0x38] sm:$0xf]
    %v124 = vld [vmem:[#allocation2 + $0x60] sm:$0xff]
    %v125 = vld [vmem:[#allocation2 + $0x68] sm:$0xf]
    %v126 = vld [vmem:[#allocation2 + $0x90] sm:$0xff]
    %v127 = vld [vmem:[#allocation2 + $0x98] sm:$0xf]
    %v128 = vld [vmem:[#allocation2 + $0xc0] sm:$0xff]
    %v129 = vld [vmem:[#allocation2 + $0xc8] sm:$0xf]
    %v130 = vld [vmem:[#allocation2 + $0xf0] sm:$0xff]
    %v131 = vld [vmem:[#allocation2 + $0xf8] sm:$0xf]
    %v132 = vld [vmem:[#allocation2 + $0x120] sm:$0xff]
    %v133 = vld [vmem:[#allocation2 + $0x128] sm:$0xf]
    %v134 = vld [vmem:[#allocation2 + $0x150] sm:$0xff]
    %v135 = vld [vmem:[#allocation2 + $0x158] sm:$0xf]
    %v136 = vld [vmem:[#allocation2 + $0x180] sm:$0xff]
    %v137 = vld [vmem:[#allocation2 + $0x188] sm:$0xf]
    %v138 = vld [vmem:[#allocation2 + $0x1b0] sm:$0xff]
    %v139 = vld [vmem:[#allocation2 + $0x1b8] sm:$0xf]
    %v140 = vld [vmem:[#allocation2 + $0x1e0] sm:$0xff]
    %v141 = vld [vmem:[#allocation2 + $0x1e8] sm:$0xf]
    %v142 = vld [vmem:[#allocation2 + $0x210] sm:$0xff]
    %v143 = vld [vmem:[#allocation2 + $0x218] sm:$0xf]
    %v144 = vld [vmem:[#allocation2 + $0x240] sm:$0xff]
    %v145 = vld [vmem:[#allocation2 + $0x248] sm:$0xf]
    %v146 = vld [vmem:[#allocation2 + $0x270] sm:$0xff]
    %v147 = vld [vmem:[#allocation2 + $0x278] sm:$0xf]
    %v148 = vld [vmem:[#allocation2 + $0x2a0] sm:$0xff]
    %v149 = vld [vmem:[#allocation2 + $0x2a8] sm:$0xf]
    %v150 = vld [vmem:[#allocation2 + $0x2d0] sm:$0xff]
    %v151 = vld [vmem:[#allocation2 + $0x2d8] sm:$0xf]
    %v152 = vld [vmem:[#allocation2 + $0x300] sm:$0xff]
    %v153 = vld [vmem:[#allocation2 + $0x308] sm:$0xf]
    %v154 = vld [vmem:[#allocation2 + $0x330] sm:$0xff]
    %v155 = vld [vmem:[#allocation2 + $0x338] sm:$0xf]
    %v156 = vld [vmem:[#allocation2 + $0x360] sm:$0xff]
    %v157 = vld [vmem:[#allocation2 + $0x368] sm:$0xf]
    %v158 = vld [vmem:[#allocation2 + $0x390] sm:$0xff]
    %v159 = vld [vmem:[#allocation2 + $0x398] sm:$0xf]
    %v160 = vld [vmem:[#allocation2 + $0x3c0] sm:$0xff]
    %v161 = vld [vmem:[#allocation2 + $0x3c8] sm:$0xf]
    %v162 = vld [vmem:[#allocation2 + $0x3f0] sm:$0xff]
    %v163 = vld [vmem:[#allocation2 + $0x3f8] sm:$0xf]
    %v164 = vld [vmem:[#allocation2 + $0x420] sm:$0xff]
    %v165 = vld [vmem:[#allocation2 + $0x428] sm:$0xf]
    %v166 = vld [vmem:[#allocation2 + $0x450] sm:$0xff]
    %v167 = vld [vmem:[#allocation2 + $0x458] sm:$0xf]
    %v168 = vld [vmem:[#allocation2 + $0x480] sm:$0xff]
    %v169 = vld [vmem:[#allocation2 + $0x488] sm:$0xf]
    %v170 = vld [vmem:[#allocation2 + $0x4b0] sm:$0xff]
    %v171 = vld [vmem:[#allocation2 + $0x4b8] sm:$0xf]
    %v172 = vld [vmem:[#allocation2 + $0x4e0] sm:$0xff]
    %v173 = vld [vmem:[#allocation2 + $0x4e8] sm:$0xf]
    %v174 = vld [vmem:[#allocation2 + $0x510] sm:$0xff]
    %v175 = vld [vmem:[#allocation2 + $0x518] sm:$0xf]
    %v176 = vld [vmem:[#allocation2 + $0x540] sm:$0xff]
    %v177 = vld [vmem:[#allocation2 + $0x548] sm:$0xf]
    %v178 = vld [vmem:[#allocation2 + $0x570] sm:$0xff]
    %v179 = vld [vmem:[#allocation2 + $0x578] sm:$0xf]
    %v180 = vld [vmem:[#allocation2 + $0x5a0] sm:$0xff]
    %v181 = vld [vmem:[#allocation2 + $0x5a8] sm:$0xf]
    %v182 = vld [vmem:[#allocation2 + $0x5d0] sm:$0xff]
    %v183 = vld [vmem:[#allocation2 + $0x5d8] sm:$0xf]
    %v184 = vld [vmem:[#allocation2 + $0x600] sm:$0xff]
    %v185 = vld [vmem:[#allocation2 + $0x608] sm:$0xf]
    %v186 = vld [vmem:[#allocation2 + $0x630] sm:$0xff]
    %v187 = vld [vmem:[#allocation2 + $0x638] sm:$0xf]
    %v188 = vld [vmem:[#allocation2 + $0x660] sm:$0xff]
    %v189 = vld [vmem:[#allocation2 + $0x668] sm:$0xf]
    %v190 = vld [vmem:[#allocation2 + $0x690] sm:$0xff]
    %v191 = vld [vmem:[#allocation2 + $0x698] sm:$0xf]
    %v192 = vld [vmem:[#allocation2 + $0x6c0] sm:$0xff]
    %v193 = vld [vmem:[#allocation2 + $0x6c8] sm:$0xf]
    %v194 = vld [vmem:[#allocation2 + $0x6f0] sm:$0xff]
    %v195 = vld [vmem:[#allocation2 + $0x6f8] sm:$0xf]
    %v196 = vld [vmem:[#allocation2 + $0x720] sm:$0xff]
    %v197 = vld [vmem:[#allocation2 + $0x728] sm:$0xf]
    %v198 = vld [vmem:[#allocation2 + $0x750] sm:$0xff]
    %v199 = vld [vmem:[#allocation2 + $0x758] sm:$0xf]
    %v200 = vld [vmem:[#allocation2 + $0x780] sm:$0xff]
    %v201 = vld [vmem:[#allocation2 + $0x788] sm:$0xf]
    %v202 = vld [vmem:[#allocation2 + $0x7b0] sm:$0xff]
    %v203 = vld [vmem:[#allocation2 + $0x7b8] sm:$0xf]
    %v204 = vld [vmem:[#allocation2 + $0x7e0] sm:$0xff]
    %v205 = vld [vmem:[#allocation2 + $0x7e8] sm:$0xf]
    %v206 = vld [vmem:[#allocation2 + $0x810] sm:$0xff]
    %v207 = vld [vmem:[#allocation2 + $0x818] sm:$0xf]
    %v208 = vld [vmem:[#allocation2 + $0x840] sm:$0xff]
    %v209 = vld [vmem:[#allocation2 + $0x848] sm:$0xf]
    %v210 = vld [vmem:[#allocation2 + $0x870] sm:$0xff]
    %v211 = vld [vmem:[#allocation2 + $0x878] sm:$0xf]
    %v212 = vld [vmem:[#allocation2 + $0x8a0] sm:$0xff]
    %v213 = vld [vmem:[#allocation2 + $0x8a8] sm:$0xf]
    %v214 = vld [vmem:[#allocation2 + $0x8d0] sm:$0xff]
    %v215 = vld [vmem:[#allocation2 + $0x8d8] sm:$0xf]
    %v216 = vld [vmem:[#allocation2 + $0x900] sm:$0xff]
    %v217 = vld [vmem:[#allocation2 + $0x908] sm:$0xf]
    %v218 = vld [vmem:[#allocation2 + $0x930] sm:$0xff]
    %v219 = vld [vmem:[#allocation2 + $0x938] sm:$0xf]
    %v220 = vld [vmem:[#allocation2 + $0x960] sm:$0xff]
    %v221 = vld [vmem:[#allocation2 + $0x968] sm:$0xf]
    %v222 = vld [vmem:[#allocation2 + $0x990] sm:$0xff]
    %v223 = vld [vmem:[#allocation2 + $0x998] sm:$0xf]
    %v224 = vld [vmem:[#allocation2 + $0x9c0] sm:$0xff]
    %v225 = vld [vmem:[#allocation2 + $0x9c8] sm:$0xf]
    %v226 = vld [vmem:[#allocation2 + $0x9f0] sm:$0xff]
    %v227 = vld [vmem:[#allocation2 + $0x9f8] sm:$0xf]
    %v228 = vld [vmem:[#allocation2 + $0xa20] sm:$0xff]
    %v229 = vld [vmem:[#allocation2 + $0xa28] sm:$0xf]
    %v230 = vld [vmem:[#allocation2 + $0xa50] sm:$0xff]
    %v231 = vld [vmem:[#allocation2 + $0xa58] sm:$0xf]
    %v232 = vld [vmem:[#allocation2 + $0xa80] sm:$0xff]
    %v233 = vld [vmem:[#allocation2 + $0xa88] sm:$0xf]
    %v234 = vld [vmem:[#allocation2 + $0xab0] sm:$0xff]
    %v235 = vld [vmem:[#allocation2 + $0xab8] sm:$0xf]
    %v236 = vld [vmem:[#allocation2 + $0xae0] sm:$0xff]
    %v237 = vld [vmem:[#allocation2 + $0xae8] sm:$0xf]
    %v238 = vld [vmem:[#allocation2 + $0xb10] sm:$0xff]
    %v239 = vld [vmem:[#allocation2 + $0xb18] sm:$0xf]
    %v240 = vld [vmem:[#allocation2 + $0xb40] sm:$0xff]
    %v241 = vld [vmem:[#allocation2 + $0xb48] sm:$0xf]
    %v242 = vld [vmem:[#allocation2 + $0xb70] sm:$0xff]
    %v243 = vld [vmem:[#allocation2 + $0xb78] sm:$0xf]
    %v244 = vld [vmem:[#allocation2 + $0xba0] sm:$0xff]
    %v245 = vld [vmem:[#allocation2 + $0xba8] sm:$0xf]
    %v246 = vld [vmem:[#allocation2 + $0xbd0] sm:$0xff]
    %v247 = vld [vmem:[#allocation2 + $0xbd8] sm:$0xf]
    %v248 = vld [vmem:[#allocation2 + $0xc00] sm:$0xff]
    %v249 = vld [vmem:[#allocation2 + $0xc08] sm:$0xf]
    %v250 = vld [vmem:[#allocation2 + $0xc30] sm:$0xff]
    %v251 = vld [vmem:[#allocation2 + $0xc38] sm:$0xf]
    %v252 = vld [vmem:[#allocation2 + $0xc60] sm:$0xff]
    %v253 = vld [vmem:[#allocation2 + $0xc68] sm:$0xf]
    %v254 = vld [vmem:[#allocation2 + $0xc90] sm:$0xff]
    %v255 = vld [vmem:[#allocation2 + $0xc98] sm:$0xf]
    %v256 = vld [vmem:[#allocation2 + $0xcc0] sm:$0xff]
    %v257 = vld [vmem:[#allocation2 + $0xcc8] sm:$0xf]
    %v258 = vld [vmem:[#allocation2 + $0xcf0] sm:$0xff]
    %v259 = vld [vmem:[#allocation2 + $0xcf8] sm:$0xf]
    %v260 = vld [vmem:[#allocation2 + $0xd20] sm:$0xff]
    %v261 = vld [vmem:[#allocation2 + $0xd28] sm:$0xf]
    %v262 = vld [vmem:[#allocation2 + $0xd50] sm:$0xff]
    %v263 = vld [vmem:[#allocation2 + $0xd58] sm:$0xf]
    %v264 = vld [vmem:[#allocation4] sm:$0x7]
    %v266 = vlaneseq
    %v267 = vshrl.u32 %v266, 7
    %v268 = vsub.s32 0, %v267
    %v269 = vrot.slane %v264, %v268
    %v270 = vlaneseq
    %v271 = vshrl.u32 %v270, 7
    %v272 = vsub.s32 1, %v271
    %v273 = vrot.slane %v264, %v272
    %v274 = vlaneseq
    %v275 = vshrl.u32 %v274, 7
    %v276 = vsub.s32 2, %v275
    %v277 = vrot.slane %v264, %v276
    %v425 = vunpack.c.l.b16 %v120
    %v426 = vunpack.c.h.b16 %v120
    %v427 = vunpack.c.l.b16 %v121
    %v428 = vunpack.c.l.b16 %v122
    %v429 = vunpack.c.h.b16 %v122
    %v430 = vunpack.c.l.b16 %v123
    %v431 = vunpack.c.l.b16 %v124
    %v432 = vunpack.c.h.b16 %v124
    %v433 = vunpack.c.l.b16 %v125
    %v434 = vunpack.c.l.b16 %v126
    %v435 = vunpack.c.h.b16 %v126
    %v436 = vunpack.c.l.b16 %v127
    %v437 = vunpack.c.l.b16 %v128
    %v438 = vunpack.c.h.b16 %v128
    %v439 = vunpack.c.l.b16 %v129
    %v440 = vunpack.c.l.b16 %v130
    %v441 = vunpack.c.h.b16 %v130
    %v442 = vunpack.c.l.b16 %v131
    %v443 = vunpack.c.l.b16 %v132
    %v444 = vunpack.c.h.b16 %v132
    %v445 = vunpack.c.l.b16 %v133
    %v446 = vunpack.c.l.b16 %v134
    %v447 = vunpack.c.h.b16 %v134
    %v448 = vunpack.c.l.b16 %v135
    %v449 = vunpack.c.l.b16 %v136
    %v450 = vunpack.c.h.b16 %v136
    %v451 = vunpack.c.l.b16 %v137
    %v452 = vunpack.c.l.b16 %v138
    %v453 = vunpack.c.h.b16 %v138
    %v454 = vunpack.c.l.b16 %v139
    %v455 = vunpack.c.l.b16 %v140
    %v456 = vunpack.c.h.b16 %v140
    %v457 = vunpack.c.l.b16 %v141
    %v458 = vunpack.c.l.b16 %v142
    %v459 = vunpack.c.h.b16 %v142
    %v460 = vunpack.c.l.b16 %v143
    %v461 = vunpack.c.l.b16 %v144
    %v462 = vunpack.c.h.b16 %v144
    %v463 = vunpack.c.l.b16 %v145
    %v464 = vunpack.c.l.b16 %v146
    %v465 = vunpack.c.h.b16 %v146
    %v466 = vunpack.c.l.b16 %v147
    %v467 = vunpack.c.l.b16 %v148
    %v468 = vunpack.c.h.b16 %v148
    %v469 = vunpack.c.l.b16 %v149
    %v470 = vunpack.c.l.b16 %v150
    %v471 = vunpack.c.h.b16 %v150
    %v472 = vunpack.c.l.b16 %v151
    %v473 = vunpack.c.l.b16 %v152
    %v474 = vunpack.c.h.b16 %v152
    %v475 = vunpack.c.l.b16 %v153
    %v476 = vunpack.c.l.b16 %v154
    %v477 = vunpack.c.h.b16 %v154
    %v478 = vunpack.c.l.b16 %v155
    %v479 = vunpack.c.l.b16 %v156
    %v480 = vunpack.c.h.b16 %v156
    %v481 = vunpack.c.l.b16 %v157
    %v482 = vunpack.c.l.b16 %v158
    %v483 = vunpack.c.h.b16 %v158
    %v484 = vunpack.c.l.b16 %v159
    %v485 = vunpack.c.l.b16 %v160
    %v486 = vunpack.c.h.b16 %v160
    %v487 = vunpack.c.l.b16 %v161
    %v488 = vunpack.c.l.b16 %v162
    %v489 = vunpack.c.h.b16 %v162
    %v490 = vunpack.c.l.b16 %v163
    %v491 = vunpack.c.l.b16 %v164
    %v492 = vunpack.c.h.b16 %v164
    %v493 = vunpack.c.l.b16 %v165
    %v494 = vunpack.c.l.b16 %v166
    %v495 = vunpack.c.h.b16 %v166
    %v496 = vunpack.c.l.b16 %v167
    %v497 = vunpack.c.l.b16 %v168
    %v498 = vunpack.c.h.b16 %v168
    %v499 = vunpack.c.l.b16 %v169
    %v500 = vunpack.c.l.b16 %v170
    %v501 = vunpack.c.h.b16 %v170
    %v502 = vunpack.c.l.b16 %v171
    %v503 = vunpack.c.l.b16 %v172
    %v504 = vunpack.c.h.b16 %v172
    %v505 = vunpack.c.l.b16 %v173
    %v506 = vunpack.c.l.b16 %v174
    %v507 = vunpack.c.h.b16 %v174
    %v508 = vunpack.c.l.b16 %v175
    %v509 = vunpack.c.l.b16 %v176
    %v510 = vunpack.c.h.b16 %v176
    %v511 = vunpack.c.l.b16 %v177
    %v512 = vunpack.c.l.b16 %v178
    %v513 = vunpack.c.h.b16 %v178
    %v514 = vunpack.c.l.b16 %v179
    %v515 = vunpack.c.l.b16 %v180
    %v516 = vunpack.c.h.b16 %v180
    %v517 = vunpack.c.l.b16 %v181
    %v518 = vunpack.c.l.b16 %v182
    %v519 = vunpack.c.h.b16 %v182
    %v520 = vunpack.c.l.b16 %v183
    %v521 = vunpack.c.l.b16 %v184
    %v522 = vunpack.c.h.b16 %v184
    %v523 = vunpack.c.l.b16 %v185
    %v524 = vunpack.c.l.b16 %v186
    %v525 = vunpack.c.h.b16 %v186
    %v526 = vunpack.c.l.b16 %v187
    %v527 = vunpack.c.l.b16 %v188
    %v528 = vunpack.c.h.b16 %v188
    %v529 = vunpack.c.l.b16 %v189
    %v530 = vunpack.c.l.b16 %v190
    %v531 = vunpack.c.h.b16 %v190
    %v532 = vunpack.c.l.b16 %v191
    %v533 = vunpack.c.l.b16 %v192
    %v534 = vunpack.c.h.b16 %v192
    %v535 = vunpack.c.l.b16 %v193
    %v536 = vunpack.c.l.b16 %v194
    %v537 = vunpack.c.h.b16 %v194
    %v538 = vunpack.c.l.b16 %v195
    %v539 = vunpack.c.l.b16 %v196
    %v540 = vunpack.c.h.b16 %v196
    %v541 = vunpack.c.l.b16 %v197
    %v542 = vunpack.c.l.b16 %v198
    %v543 = vunpack.c.h.b16 %v198
    %v544 = vunpack.c.l.b16 %v199
    %v545 = vunpack.c.l.b16 %v200
    %v546 = vunpack.c.h.b16 %v200
    %v547 = vunpack.c.l.b16 %v201
    %v548 = vunpack.c.l.b16 %v202
    %v549 = vunpack.c.h.b16 %v202
    %v550 = vunpack.c.l.b16 %v203
    %v551 = vunpack.c.l.b16 %v204
    %v552 = vunpack.c.h.b16 %v204
    %v553 = vunpack.c.l.b16 %v205
    %v554 = vunpack.c.l.b16 %v206
    %v555 = vunpack.c.h.b16 %v206
    %v556 = vunpack.c.l.b16 %v207
    %v557 = vunpack.c.l.b16 %v208
    %v558 = vunpack.c.h.b16 %v208
    %v559 = vunpack.c.l.b16 %v209
    %v560 = vunpack.c.l.b16 %v210
    %v561 = vunpack.c.h.b16 %v210
    %v562 = vunpack.c.l.b16 %v211
    %v563 = vunpack.c.l.b16 %v212
    %v564 = vunpack.c.h.b16 %v212
    %v565 = vunpack.c.l.b16 %v213
    %v566 = vunpack.c.l.b16 %v214
    %v567 = vunpack.c.h.b16 %v214
    %v568 = vunpack.c.l.b16 %v215
    %v569 = vunpack.c.l.b16 %v216
    %v570 = vunpack.c.h.b16 %v216
    %v571 = vunpack.c.l.b16 %v217
    %v572 = vunpack.c.l.b16 %v218
    %v573 = vunpack.c.h.b16 %v218
    %v574 = vunpack.c.l.b16 %v219
    %v575 = vunpack.c.l.b16 %v220
    %v576 = vunpack.c.h.b16 %v220
    %v577 = vunpack.c.l.b16 %v221
    %v578 = vunpack.c.l.b16 %v222
    %v579 = vunpack.c.h.b16 %v222
    %v580 = vunpack.c.l.b16 %v223
    %v581 = vunpack.c.l.b16 %v224
    %v582 = vunpack.c.h.b16 %v224
    %v583 = vunpack.c.l.b16 %v225
    %v584 = vunpack.c.l.b16 %v226
    %v585 = vunpack.c.h.b16 %v226
    %v586 = vunpack.c.l.b16 %v227
    %v587 = vunpack.c.l.b16 %v228
    %v588 = vunpack.c.h.b16 %v228
    %v589 = vunpack.c.l.b16 %v229
    %v590 = vunpack.c.l.b16 %v230
    %v591 = vunpack.c.h.b16 %v230
    %v592 = vunpack.c.l.b16 %v231
    %v593 = vunpack.c.l.b16 %v232
    %v594 = vunpack.c.h.b16 %v232
    %v595 = vunpack.c.l.b16 %v233
    %v596 = vunpack.c.l.b16 %v234
    %v597 = vunpack.c.h.b16 %v234
    %v598 = vunpack.c.l.b16 %v235
    %v599 = vunpack.c.l.b16 %v236
    %v600 = vunpack.c.h.b16 %v236
    %v601 = vunpack.c.l.b16 %v237
    %v602 = vunpack.c.l.b16 %v238
    %v603 = vunpack.c.h.b16 %v238
    %v604 = vunpack.c.l.b16 %v239
    %v605 = vunpack.c.l.b16 %v240
    %v606 = vunpack.c.h.b16 %v240
    %v607 = vunpack.c.l.b16 %v241
    %v608 = vunpack.c.l.b16 %v242
    %v609 = vunpack.c.h.b16 %v242
    %v610 = vunpack.c.l.b16 %v243
    %v611 = vunpack.c.l.b16 %v244
    %v612 = vunpack.c.h.b16 %v244
    %v613 = vunpack.c.l.b16 %v245
    %v614 = vunpack.c.l.b16 %v246
    %v615 = vunpack.c.h.b16 %v246
    %v616 = vunpack.c.l.b16 %v247
    %v617 = vunpack.c.l.b16 %v248
    %v618 = vunpack.c.h.b16 %v248
    %v619 = vunpack.c.l.b16 %v249
    %v620 = vunpack.c.l.b16 %v250
    %v621 = vunpack.c.h.b16 %v250
    %v622 = vunpack.c.l.b16 %v251
    %v623 = vunpack.c.l.b16 %v252
    %v624 = vunpack.c.h.b16 %v252
    %v625 = vunpack.c.l.b16 %v253
    %v626 = vunpack.c.l.b16 %v254
    %v627 = vunpack.c.h.b16 %v254
    %v628 = vunpack.c.l.b16 %v255
    %v629 = vunpack.c.l.b16 %v256
    %v630 = vunpack.c.h.b16 %v256
    %v631 = vunpack.c.l.b16 %v257
    %v632 = vunpack.c.l.b16 %v258
    %v633 = vunpack.c.h.b16 %v258
    %v634 = vunpack.c.l.b16 %v259
    %v635 = vunpack.c.l.b16 %v260
    %v636 = vunpack.c.h.b16 %v260
    %v637 = vunpack.c.l.b16 %v261
    %v638 = vunpack.c.l.b16 %v262
    %v639 = vunpack.c.h.b16 %v262
    %v640 = vunpack.c.l.b16 %v263
    %v641 = vpack.c.b16 %v428, %v425
    %v642 = vpack.c.b16 %v429, %v426
    %v643 = vpack.c.b16 %v430, %v427
    %v644 = vpack.c.b16 %v434, %v431
    %v645 = vpack.c.b16 %v435, %v432
    %v646 = vpack.c.b16 %v436, %v433
    %v647 = vpack.c.b16 %v440, %v437
    %v648 = vpack.c.b16 %v441, %v438
    %v649 = vpack.c.b16 %v442, %v439
    %v650 = vpack.c.b16 %v446, %v443
    %v651 = vpack.c.b16 %v447, %v444
    %v652 = vpack.c.b16 %v448, %v445
    %v653 = vpack.c.b16 %v452, %v449
    %v654 = vpack.c.b16 %v453, %v450
    %v655 = vpack.c.b16 %v454, %v451
    %v656 = vpack.c.b16 %v458, %v455
    %v657 = vpack.c.b16 %v459, %v456
    %v658 = vpack.c.b16 %v460, %v457
    %v659 = vpack.c.b16 %v464, %v461
    %v660 = vpack.c.b16 %v465, %v462
    %v661 = vpack.c.b16 %v466, %v463
    %v662 = vpack.c.b16 %v470, %v467
    %v663 = vpack.c.b16 %v471, %v468
    %v664 = vpack.c.b16 %v472, %v469
    %v665 = vpack.c.b16 %v476, %v473
    %v666 = vpack.c.b16 %v477, %v474
    %v667 = vpack.c.b16 %v478, %v475
    %v668 = vpack.c.b16 %v482, %v479
    %v669 = vpack.c.b16 %v483, %v480
    %v670 = vpack.c.b16 %v484, %v481
    %v671 = vpack.c.b16 %v488, %v485
    %v672 = vpack.c.b16 %v489, %v486
    %v673 = vpack.c.b16 %v490, %v487
    %v674 = vpack.c.b16 %v494, %v491
    %v675 = vpack.c.b16 %v495, %v492
    %v676 = vpack.c.b16 %v496, %v493
    %v677 = vpack.c.b16 %v500, %v497
    %v678 = vpack.c.b16 %v501, %v498
    %v679 = vpack.c.b16 %v502, %v499
    %v680 = vpack.c.b16 %v506, %v503
    %v681 = vpack.c.b16 %v507, %v504
    %v682 = vpack.c.b16 %v508, %v505
    %v683 = vpack.c.b16 %v512, %v509
    %v684 = vpack.c.b16 %v513, %v510
    %v685 = vpack.c.b16 %v514, %v511
    %v686 = vpack.c.b16 %v518, %v515
    %v687 = vpack.c.b16 %v519, %v516
    %v688 = vpack.c.b16 %v520, %v517
    %v689 = vpack.c.b16 %v524, %v521
    %v690 = vpack.c.b16 %v525, %v522
    %v691 = vpack.c.b16 %v526, %v523
    %v692 = vpack.c.b16 %v530, %v527
    %v693 = vpack.c.b16 %v531, %v528
    %v694 = vpack.c.b16 %v532, %v529
    %v695 = vpack.c.b16 %v536, %v533
    %v696 = vpack.c.b16 %v537, %v534
    %v697 = vpack.c.b16 %v538, %v535
    %v698 = vpack.c.b16 %v542, %v539
    %v699 = vpack.c.b16 %v543, %v540
    %v700 = vpack.c.b16 %v544, %v541
    %v701 = vpack.c.b16 %v548, %v545
    %v702 = vpack.c.b16 %v549, %v546
    %v703 = vpack.c.b16 %v550, %v547
    %v704 = vpack.c.b16 %v554, %v551
    %v705 = vpack.c.b16 %v555, %v552
    %v706 = vpack.c.b16 %v556, %v553
    %v707 = vpack.c.b16 %v560, %v557
    %v708 = vpack.c.b16 %v561, %v558
    %v709 = vpack.c.b16 %v562, %v559
    %v710 = vpack.c.b16 %v566, %v563
    %v711 = vpack.c.b16 %v567, %v564
    %v712 = vpack.c.b16 %v568, %v565
    %v713 = vpack.c.b16 %v572, %v569
    %v714 = vpack.c.b16 %v573, %v570
    %v715 = vpack.c.b16 %v574, %v571
    %v716 = vpack.c.b16 %v578, %v575
    %v717 = vpack.c.b16 %v579, %v576
    %v718 = vpack.c.b16 %v580, %v577
    %v719 = vpack.c.b16 %v584, %v581
    %v720 = vpack.c.b16 %v585, %v582
    %v721 = vpack.c.b16 %v586, %v583
    %v722 = vpack.c.b16 %v590, %v587
    %v723 = vpack.c.b16 %v591, %v588
    %v724 = vpack.c.b16 %v592, %v589
    %v725 = vpack.c.b16 %v596, %v593
    %v726 = vpack.c.b16 %v597, %v594
    %v727 = vpack.c.b16 %v598, %v595
    %v728 = vpack.c.b16 %v602, %v599
    %v729 = vpack.c.b16 %v603, %v600
    %v730 = vpack.c.b16 %v604, %v601
    %v731 = vpack.c.b16 %v608, %v605
    %v732 = vpack.c.b16 %v609, %v606
    %v733 = vpack.c.b16 %v610, %v607
    %v734 = vpack.c.b16 %v614, %v611
    %v735 = vpack.c.b16 %v615, %v612
    %v736 = vpack.c.b16 %v616, %v613
    %v737 = vpack.c.b16 %v620, %v617
    %v738 = vpack.c.b16 %v621, %v618
    %v739 = vpack.c.b16 %v622, %v619
    %v740 = vpack.c.b16 %v626, %v623
    %v741 = vpack.c.b16 %v627, %v624
    %v742 = vpack.c.b16 %v628, %v625
    %v743 = vpack.c.b16 %v632, %v629
    %v744 = vpack.c.b16 %v633, %v630
    %v745 = vpack.c.b16 %v634, %v631
    %v746 = vpack.c.b16 %v638, %v635
    %v747 = vpack.c.b16 %v639, %v636
    %v748 = vpack.c.b16 %v640, %v637
    %vm857 = vcmask 523264
    %v859 = vsel %vm857, %v119, 0
    %861 = vmatprep.subr.bf16.mxu0 %v642
    %862 = vmatpush1.bf16.msra.mxu0 %v641
    %863 = vmatprep.subr.bf16.mxu0 %v645
    %864 = vmatpush1.bf16.msra.mxu0 %v644
    %865 = vmatprep.subr.bf16.mxu0 %v648
    %866 = vmatpush1.bf16.msra.mxu0 %v647
    %867 = vmatprep.subr.bf16.mxu0 %v651
    %868 = vmatpush1.bf16.msra.mxu0 %v650
    %869 = vmatprep.subr.bf16.mxu0 %v654
    %870 = vmatpush1.bf16.msra.mxu0 %v653
    %871 = vmatprep.subr.bf16.mxu0 %v657
    %872 = vmatpush1.bf16.msra.mxu0 %v656
    %873 = vmatprep.subr.bf16.mxu0 %v660
    %874 = vmatpush1.bf16.msra.mxu0 %v659
    %875 = vmatprep.subr.bf16.mxu0 %v663
    %876 = vmatpush1.bf16.msra.mxu0 %v662
    %877 = vmatprep.subr.bf16.mxu0 %v666
    %878 = vmatpush1.bf16.msra.mxu0 %v665
    %879 = vmatprep.subr.bf16.mxu0 %v669
    %880 = vmatpush1.bf16.msra.mxu0 %v668
    %881 = vmatprep.subr.bf16.mxu0 %v672
    %882 = vmatpush1.bf16.msra.mxu0 %v671
    %883 = vmatprep.subr.bf16.mxu0 %v675
    %884 = vmatpush1.bf16.msra.mxu0 %v674
    %885 = vmatprep.subr.bf16.mxu0 %v678
    %886 = vmatpush1.bf16.msra.mxu0 %v677
    %887 = vmatprep.subr.bf16.mxu0 %v681
    %888 = vmatpush1.bf16.msra.mxu0 %v680
    %889 = vmatprep.subr.bf16.mxu0 %v684
    %890 = vmatpush1.bf16.msra.mxu0 %v683
    %891 = vmatprep.subr.bf16.mxu0 %v687
    %892 = vmatpush1.bf16.msra.mxu0 %v686
    %893 = vmatprep.mubr.bf16.mxu0 %v116
    %894 = vmatmul.mubr.bf16.gmra.mrb[0].mxu0 %v115
    %v895 = vpop.f32.mrb[0].mxu0
    %v896 = vadd.f32 %v269, %v895
    %v897 = vpop.f32.mrb[0].mxu0
    %v898 = vadd.f32 %v273, %v897
    %v899 = vpop.f32.mrb[0].mxu0
    %v900 = vpop.f32.mrb[0].mxu0
    %901 = vdwg.mxu0
    %902 = vmatprep.subr.bf16.mxu0 %v690
    %903 = vmatpush1.bf16.msra.mxu0 %v689
    %904 = vmatprep.subr.bf16.mxu0 %v693
    %905 = vmatpush1.bf16.msra.mxu0 %v692
    %906 = vmatprep.subr.bf16.mxu0 %v696
    %907 = vmatpush1.bf16.msra.mxu0 %v695
    %908 = vmatprep.subr.bf16.mxu0 %v699
    %909 = vmatpush1.bf16.msra.mxu0 %v698
    %910 = vmatprep.subr.bf16.mxu0 %v702
    %911 = vmatpush1.bf16.msra.mxu0 %v701
    %912 = vmatprep.subr.bf16.mxu0 %v705
    %913 = vmatpush1.bf16.msra.mxu0 %v704
    %914 = vmatprep.subr.bf16.mxu0 %v708
    %915 = vmatpush1.bf16.msra.mxu0 %v707
    %916 = vmatprep.subr.bf16.mxu0 %v711
    %917 = vmatpush1.bf16.msra.mxu0 %v710
    %918 = vmatprep.subr.bf16.mxu0 %v714
    %919 = vmatpush1.bf16.msra.mxu0 %v713
    %920 = vmatprep.subr.bf16.mxu0 %v717
    %921 = vmatpush1.bf16.msra.mxu0 %v716
    %922 = vmatprep.subr.bf16.mxu0 %v720
    %923 = vmatpush1.bf16.msra.mxu0 %v719
    %924 = vmatprep.subr.bf16.mxu0 %v723
    %925 = vmatpush1.bf16.msra.mxu0 %v722
    %926 = vmatprep.subr.bf16.mxu0 %v726
    %927 = vmatpush1.bf16.msra.mxu0 %v725
    %928 = vmatprep.subr.bf16.mxu0 %v729
    %929 = vmatpush1.bf16.msra.mxu0 %v728
    %930 = vmatprep.subr.bf16.mxu0 %v732
    %931 = vmatpush1.bf16.msra.mxu0 %v731
    %932 = vmatprep.subr.bf16.mxu0 %v735
    %933 = vmatpush1.bf16.msra.mxu0 %v734
    %934 = vmatprep.mubr.bf16.mxu0 %v118
    %935 = vmatmul.mubr.bf16.gmra.mrb[0].mxu0 %v117
    %v936 = vpop.f32.mrb[0].mxu0
    %v937 = vadd.f32 %v896, %v936
    %v938 = vpop.f32.mrb[0].mxu0
    %v939 = vadd.f32 %v898, %v938
    %v940 = vpop.f32.mrb[0].mxu0
    %v941 = vpop.f32.mrb[0].mxu0
    %942 = vdwg.mxu0
    %943 = vmatprep.subr.bf16.mxu0 %v738
    %944 = vmatpush1.bf16.msra.mxu0 %v737
    %945 = vmatprep.subr.bf16.mxu0 %v741
    %946 = vmatpush1.bf16.msra.mxu0 %v740
    %947 = vmatprep.subr.bf16.mxu0 %v744
    %948 = vmatpush1.bf16.msra.mxu0 %v743
    %949 = vmatprep.subr.bf16.mxu0 %v747
    %950 = vmatpush1.bf16.msra.mxu0 %v746
    %951 = vmatprep.subr.bf16.mxu0 0
    %952 = vmatpush1.bf16.msra.mxu0 0
    %953 = vmatprep.subr.bf16.mxu0 0
    %954 = vmatpush1.bf16.msra.mxu0 0
    %955 = vmatprep.subr.bf16.mxu0 0
    %956 = vmatpush1.bf16.msra.mxu0 0
    %957 = vmatprep.subr.bf16.mxu0 0
    %958 = vmatpush1.bf16.msra.mxu0 0
    %959 = vmatprep.subr.bf16.mxu0 0
    %960 = vmatpush1.bf16.msra.mxu0 0
    %961 = vmatprep.subr.bf16.mxu0 0
    %962 = vmatpush1.bf16.msra.mxu0 0
    %963 = vmatprep.subr.bf16.mxu0 0
    %964 = vmatpush1.bf16.msra.mxu0 0
    %965 = vmatprep.subr.bf16.mxu0 0
    %966 = vmatpush1.bf16.msra.mxu0 0
    %967 = vmatprep.subr.bf16.mxu0 0
    %968 = vmatpush1.bf16.msra.mxu0 0
    %969 = vmatprep.subr.bf16.mxu0 0
    %970 = vmatpush1.bf16.msra.mxu0 0
    %971 = vmatprep.subr.bf16.mxu0 0
    %972 = vmatpush1.bf16.msra.mxu0 0
    %973 = vmatprep.subr.bf16.mxu0 0
    %974 = vmatpush1.bf16.msra.mxu0 0
    %975 = vmatprep.mubr.bf16.mxu0 0
    %976 = vmatmul.mubr.bf16.gmra.mrb[0].mxu0 %v859
    %v977 = vpop.f32.mrb[0].mxu0
    %v978 = vadd.f32 %v937, %v977
    %v979 = vpop.f32.mrb[0].mxu0
    %v980 = vadd.f32 %v939, %v979
    %v981 = vpop.f32.mrb[0].mxu0
    %v982 = vpop.f32.mrb[0].mxu0
    %983 = vdwg.mxu0
    %984 = vmatprep.subr.bf16.mxu0 0
    %985 = vmatpush1.bf16.msra.mxu0 %v643
    %986 = vmatprep.subr.bf16.mxu0 0
    %987 = vmatpush1.bf16.msra.mxu0 %v646
    %988 = vmatprep.subr.bf16.mxu0 0
    %989 = vmatpush1.bf16.msra.mxu0 %v649
    %990 = vmatprep.subr.bf16.mxu0 0
    %991 = vmatpush1.bf16.msra.mxu0 %v652
    %992 = vmatprep.subr.bf16.mxu0 0
    %993 = vmatpush1.bf16.msra.mxu0 %v655
    %994 = vmatprep.subr.bf16.mxu0 0
    %995 = vmatpush1.bf16.msra.mxu0 %v658
    %996 = vmatprep.subr.bf16.mxu0 0
    %997 = vmatpush1.bf16.msra.mxu0 %v661
    %998 = vmatprep.subr.bf16.mxu0 0
    %999 = vmatpush1.bf16.msra.mxu0 %v664
    %1000 = vmatprep.subr.bf16.mxu0 0
    %1001 = vmatpush1.bf16.msra.mxu0 %v667
    %1002 = vmatprep.subr.bf16.mxu0 0
    %1003 = vmatpush1.bf16.msra.mxu0 %v670
    %1004 = vmatprep.subr.bf16.mxu0 0
    %1005 = vmatpush1.bf16.msra.mxu0 %v673
    %1006 = vmatprep.subr.bf16.mxu0 0
    %1007 = vmatpush1.bf16.msra.mxu0 %v676
    %1008 = vmatprep.subr.bf16.mxu0 0
    %1009 = vmatpush1.bf16.msra.mxu0 %v679
    %1010 = vmatprep.subr.bf16.mxu0 0
    %1011 = vmatpush1.bf16.msra.mxu0 %v682
    %1012 = vmatprep.subr.bf16.mxu0 0
    %1013 = vmatpush1.bf16.msra.mxu0 %v685
    %1014 = vmatprep.subr.bf16.mxu0 0
    %1015 = vmatpush1.bf16.msra.mxu0 %v688
    %1016 = vmatprep.mubr.bf16.mxu0 %v116
    %1017 = vmatmul.mubr.bf16.gmra.mrb[0].mxu0 %v115
    %v1018 = vpop.f32.mrb[0].mxu0
    %v1019 = vadd.f32 %v277, %v1018
    %v1020 = vpop.f32.mrb[0].mxu0
    %v1021 = vpop.f32.mrb[0].mxu0
    %v1022 = vpop.f32.mrb[0].mxu0
    %1023 = vdwg.mxu0
    %1024 = vmatprep.subr.bf16.mxu0 0
    %1025 = vmatpush1.bf16.msra.mxu0 %v691
    %1026 = vmatprep.subr.bf16.mxu0 0
    %1027 = vmatpush1.bf16.msra.mxu0 %v694
    %1028 = vmatprep.subr.bf16.mxu0 0
    %1029 = vmatpush1.bf16.msra.mxu0 %v697
    %1030 = vmatprep.subr.bf16.mxu0 0
    %1031 = vmatpush1.bf16.msra.mxu0 %v700
    %1032 = vmatprep.subr.bf16.mxu0 0
    %1033 = vmatpush1.bf16.msra.mxu0 %v703
    %1034 = vmatprep.subr.bf16.mxu0 0
    %1035 = vmatpush1.bf16.msra.mxu0 %v706
    %1036 = vmatprep.subr.bf16.mxu0 0
    %1037 = vmatpush1.bf16.msra.mxu0 %v709
    %1038 = vmatprep.subr.bf16.mxu0 0
    %1039 = vmatpush1.bf16.msra.mxu0 %v712
    %1040 = vmatprep.subr.bf16.mxu0 0
    %1041 = vmatpush1.bf16.msra.mxu0 %v715
    %1042 = vmatprep.subr.bf16.mxu0 0
    %1043 = vmatpush1.bf16.msra.mxu0 %v718
    %1044 = vmatprep.subr.bf16.mxu0 0
    %1045 = vmatpush1.bf16.msra.mxu0 %v721
    %1046 = vmatprep.subr.bf16.mxu0 0
    %1047 = vmatpush1.bf16.msra.mxu0 %v724
    %1048 = vmatprep.subr.bf16.mxu0 0
    %1049 = vmatpush1.bf16.msra.mxu0 %v727
    %1050 = vmatprep.subr.bf16.mxu0 0
    %1051 = vmatpush1.bf16.msra.mxu0 %v730
    %1052 = vmatprep.subr.bf16.mxu0 0
    %1053 = vmatpush1.bf16.msra.mxu0 %v733
    %1054 = vmatprep.subr.bf16.mxu0 0
    %1055 = vmatpush1.bf16.msra.mxu0 %v736
    %1056 = vmatprep.mubr.bf16.mxu0 %v118
    %1057 = vmatmul.mubr.bf16.gmra.mrb[0].mxu0 %v117
    %v1058 = vpop.f32.mrb[0].mxu0
    %v1059 = vadd.f32 %v1019, %v1058
    %v1060 = vpop.f32.mrb[0].mxu0
    %v1061 = vpop.f32.mrb[0].mxu0
    %v1062 = vpop.f32.mrb[0].mxu0
    %1063 = vdwg.mxu0
    %1064 = vmatprep.subr.bf16.mxu0 0
    %1065 = vmatpush1.bf16.msra.mxu0 %v739
    %1066 = vmatprep.subr.bf16.mxu0 0
    %1067 = vmatpush1.bf16.msra.mxu0 %v742
    %1068 = vmatprep.subr.bf16.mxu0 0
    %1069 = vmatpush1.bf16.msra.mxu0 %v745
    %1070 = vmatprep.subr.bf16.mxu0 0
    %1071 = vmatpush1.bf16.msra.mxu0 %v748
    %1072 = vmatprep.subr.bf16.mxu0 0
    %1073 = vmatpush1.bf16.msra.mxu0 0
    %1074 = vmatprep.subr.bf16.mxu0 0
    %1075 = vmatpush1.bf16.msra.mxu0 0
    %1076 = vmatprep.subr.bf16.mxu0 0
    %1077 = vmatpush1.bf16.msra.mxu0 0
    %1078 = vmatprep.subr.bf16.mxu0 0
    %1079 = vmatpush1.bf16.msra.mxu0 0
    %1080 = vmatprep.subr.bf16.mxu0 0
    %1081 = vmatpush1.bf16.msra.mxu0 0
    %1082 = vmatprep.subr.bf16.mxu0 0
    %1083 = vmatpush1.bf16.msra.mxu0 0
    %1084 = vmatprep.subr.bf16.mxu0 0
    %1085 = vmatpush1.bf16.msra.mxu0 0
    %1086 = vmatprep.subr.bf16.mxu0 0
    %1087 = vmatpush1.bf16.msra.mxu0 0
    %1088 = vmatprep.subr.bf16.mxu0 0
    %1089 = vmatpush1.bf16.msra.mxu0 0
    %1090 = vmatprep.subr.bf16.mxu0 0
    %1091 = vmatpush1.bf16.msra.mxu0 0
    %1092 = vmatprep.subr.bf16.mxu0 0
    %1093 = vmatpush1.bf16.msra.mxu0 0
    %1094 = vmatprep.subr.bf16.mxu0 0
    %1095 = vmatpush1.bf16.msra.mxu0 0
    %1096 = vmatprep.mubr.bf16.mxu0 0
    %1097 = vmatmul.mubr.bf16.gmra.mrb[0].mxu0 %v859
    %v1098 = vpop.f32.mrb[0].mxu0
    %v1099 = vadd.f32 %v1059, %v1098
    %v1100 = vpop.f32.mrb[0].mxu0
    %v1101 = vpop.f32.mrb[0].mxu0
    %v1102 = vpop.f32.mrb[0].mxu0
    %1103 = vdwg.mxu0
    %v1104 = vmul.f32 %v978, 0.2
    %v1105 = vmul.f32 %v980, 0.2
    %v1106 = vmul.f32 %v1099, 0.2
    %v1107 = vmax.f32 %v978, %v1104
    %v1108 = vmax.f32 %v980, %v1105
    %v1109 = vmax.f32 %v1099, %v1106
    %v1110 = vpack.c.bf16 %v1107, %v1107
    %v1111 = vpack.c.bf16 %v1108, %v1108
    %v1112 = vpack.c.bf16 %v1109, %v1109
    %v1113 = vld [vmem:[#allocation2 + $0xc] sm:$0xff]
    %v1114 = vld [vmem:[#allocation2 + $0x3c] sm:$0xff]
    %v1115 = vld [vmem:[#allocation2 + $0x6c] sm:$0xff]
    %v1116 = vld [vmem:[#allocation2 + $0x9c] sm:$0xff]
    %v1117 = vld [vmem:[#allocation2 + $0xcc] sm:$0xff]
    %v1118 = vld [vmem:[#allocation2 + $0xfc] sm:$0xff]
    %v1119 = vld [vmem:[#allocation2 + $0x12c] sm:$0xff]
    %v1120 = vld [vmem:[#allocation2 + $0x15c] sm:$0xff]
    %v1121 = vld [vmem:[#allocation2 + $0x18c] sm:$0xff]
    %v1122 = vld [vmem:[#allocation2 + $0x1bc] sm:$0xff]
    %v1123 = vld [vmem:[#allocation2 + $0x1ec] sm:$0xff]
    %v1124 = vld [vmem:[#allocation2 + $0x21c] sm:$0xff]
    %v1125 = vld [vmem:[#allocation2 + $0x24c] sm:$0xff]
    %v1126 = vld [vmem:[#allocation2 + $0x27c] sm:$0xff]
    %v1127 = vld [vmem:[#allocation2 + $0x2ac] sm:$0xff]
    %v1128 = vld [vmem:[#allocation2 + $0x2dc] sm:$0xff]
    %v1129 = vld [vmem:[#allocation2 + $0x30c] sm:$0xff]
    %v1130 = vld [vmem:[#allocation2 + $0x33c] sm:$0xff]
    %v1131 = vld [vmem:[#allocation2 + $0x36c] sm:$0xff]
    %v1132 = vld [vmem:[#allocation2 + $0x39c] sm:$0xff]
    %v1133 = vld [vmem:[#allocation2 + $0x3cc] sm:$0xff]
    %v1134 = vld [vmem:[#allocation2 + $0x3fc] sm:$0xff]
    %v1135 = vld [vmem:[#allocation2 + $0x42c] sm:$0xff]
    %v1136 = vld [vmem:[#allocation2 + $0x45c] sm:$0xff]
    %v1137 = vld [vmem:[#allocation2 + $0x48c] sm:$0xff]
    %v1138 = vld [vmem:[#allocation2 + $0x4bc] sm:$0xff]
    %v1139 = vld [vmem:[#allocation2 + $0x4ec] sm:$0xff]
    %v1140 = vld [vmem:[#allocation2 + $0x51c] sm:$0xff]
    %v1141 = vld [vmem:[#allocation2 + $0x54c] sm:$0xff]
    %v1142 = vld [vmem:[#allocation2 + $0x57c] sm:$0xff]
    %v1143 = vld [vmem:[#allocation2 + $0x5ac] sm:$0xff]
    %v1144 = vld [vmem:[#allocation2 + $0x5dc] sm:$0xff]
    %v1145 = vld [vmem:[#allocation2 + $0x60c] sm:$0xff]
    %v1146 = vld [vmem:[#allocation2 + $0x63c] sm:$0xff]
    %v1147 = vld [vmem:[#allocation2 + $0x66c] sm:$0xff]
    %v1148 = vld [vmem:[#allocation2 + $0x69c] sm:$0xff]
    %v1149 = vld [vmem:[#allocation2 + $0x6cc] sm:$0xff]
    %v1150 = vld [vmem:[#allocation2 + $0x6fc] sm:$0xff]
    %v1151 = vld [vmem:[#allocation2 + $0x72c] sm:$0xff]
    %v1152 = vld [vmem:[#allocation2 + $0x75c] sm:$0xff]
    %v1153 = vld [vmem:[#allocation2 + $0x78c] sm:$0xff]
    %v1154 = vld [vmem:[#allocation2 + $0x7bc] sm:$0xff]
    %v1155 = vld [vmem:[#allocation2 + $0x7ec] sm:$0xff]
    %v1156 = vld [vmem:[#allocation2 + $0x81c] sm:$0xff]
    %v1157 = vld [vmem:[#allocation2 + $0x84c] sm:$0xff]
    %v1158 = vld [vmem:[#allocation2 + $0x87c] sm:$0xff]
    %v1159 = vld [vmem:[#allocation2 + $0x8ac] sm:$0xff]
    %v1160 = vld [vmem:[#allocation2 + $0x8dc] sm:$0xff]
    %v1161 = vld [vmem:[#allocation4 + $0x3] sm:$0x3]
    %v1163 = vlaneseq
    %v1164 = vshrl.u32 %v1163, 7
    %v1165 = vsub.s32 0, %v1164
    %v1166 = vrot.slane %v1161, %v1165
    %v1167 = vlaneseq
    %v1168 = vshrl.u32 %v1167, 7
    %v1169 = vsub.s32 1, %v1168
    %v1170 = vrot.slane %v1161, %v1169
    %v1221 = vunpack.c.l.b16 %v1113
    %v1222 = vunpack.c.h.b16 %v1113
    %v1223 = vunpack.c.l.b16 %v1114
    %v1224 = vunpack.c.h.b16 %v1114
    %v1225 = vunpack.c.l.b16 %v1115
    %v1226 = vunpack.c.h.b16 %v1115
    %v1227 = vunpack.c.l.b16 %v1116
    %v1228 = vunpack.c.h.b16 %v1116
    %v1229 = vunpack.c.l.b16 %v1117
    %v1230 = vunpack.c.h.b16 %v1117
    %v1231 = vunpack.c.l.b16 %v1118
    %v1232 = vunpack.c.h.b16 %v1118
    %v1233 = vunpack.c.l.b16 %v1119
    %v1234 = vunpack.c.h.b16 %v1119
    %v1235 = vunpack.c.l.b16 %v1120
    %v1236 = vunpack.c.h.b16 %v1120
    %v1237 = vunpack.c.l.b16 %v1121
    %v1238 = vunpack.c.h.b16 %v1121
    %v1239 = vunpack.c.l.b16 %v1122
    %v1240 = vunpack.c.h.b16 %v1122
    %v1241 = vunpack.c.l.b16 %v1123
    %v1242 = vunpack.c.h.b16 %v1123
    %v1243 = vunpack.c.l.b16 %v1124
    %v1244 = vunpack.c.h.b16 %v1124
    %v1245 = vunpack.c.l.b16 %v1125
    %v1246 = vunpack.c.h.b16 %v1125
    %v1247 = vunpack.c.l.b16 %v1126
    %v1248 = vunpack.c.h.b16 %v1126
    %v1249 = vunpack.c.l.b16 %v1127
    %v1250 = vunpack.c.h.b16 %v1127
    %v1251 = vunpack.c.l.b16 %v1128
    %v1252 = vunpack.c.h.b16 %v1128
    %v1253 = vunpack.c.l.b16 %v1129
    %v1254 = vunpack.c.h.b16 %v1129
    %v1255 = vunpack.c.l.b16 %v1130
    %v1256 = vunpack.c.h.b16 %v1130
    %v1257 = vunpack.c.l.b16 %v1131
    %v1258 = vunpack.c.h.b16 %v1131
    %v1259 = vunpack.c.l.b16 %v1132
    %v1260 = vunpack.c.h.b16 %v1132
    %v1261 = vunpack.c.l.b16 %v1133
    %v1262 = vunpack.c.h.b16 %v1133
    %v1263 = vunpack.c.l.b16 %v1134
    %v1264 = vunpack.c.h.b16 %v1134
    %v1265 = vunpack.c.l.b16 %v1135
    %v1266 = vunpack.c.h.b16 %v1135
    %v1267 = vunpack.c.l.b16 %v1136
    %v1268 = vunpack.c.h.b16 %v1136
    %v1269 = vunpack.c.l.b16 %v1137
    %v1270 = vunpack.c.h.b16 %v1137
    %v1271 = vunpack.c.l.b16 %v1138
    %v1272 = vunpack.c.h.b16 %v1138
    %v1273 = vunpack.c.l.b16 %v1139
    %v1274 = vunpack.c.h.b16 %v1139
    %v1275 = vunpack.c.l.b16 %v1140
    %v1276 = vunpack.c.h.b16 %v1140
    %v1277 = vunpack.c.l.b16 %v1141
    %v1278 = vunpack.c.h.b16 %v1141
    %v1279 = vunpack.c.l.b16 %v1142
    %v1280 = vunpack.c.h.b16 %v1142
    %v1281 = vunpack.c.l.b16 %v1143
    %v1282 = vunpack.c.h.b16 %v1143
    %v1283 = vunpack.c.l.b16 %v1144
    %v1284 = vunpack.c.h.b16 %v1144
    %v1285 = vunpack.c.l.b16 %v1145
    %v1286 = vunpack.c.h.b16 %v1145
    %v1287 = vunpack.c.l.b16 %v1146
    %v1288 = vunpack.c.h.b16 %v1146
    %v1289 = vunpack.c.l.b16 %v1147
    %v1290 = vunpack.c.h.b16 %v1147
    %v1291 = vunpack.c.l.b16 %v1148
    %v1292 = vunpack.c.h.b16 %v1148
    %v1293 = vunpack.c.l.b16 %v1149
    %v1294 = vunpack.c.h.b16 %v1149
    %v1295 = vunpack.c.l.b16 %v1150
    %v1296 = vunpack.c.h.b16 %v1150
    %v1297 = vunpack.c.l.b16 %v1151
    %v1298 = vunpack.c.h.b16 %v1151
    %v1299 = vunpack.c.l.b16 %v1152
    %v1300 = vunpack.c.h.b16 %v1152
    %v1301 = vunpack.c.l.b16 %v1153
    %v1302 = vunpack.c.h.b16 %v1153
    %v1303 = vunpack.c.l.b16 %v1154
    %v1304 = vunpack.c.h.b16 %v1154
    %v1305 = vunpack.c.l.b16 %v1155
    %v1306 = vunpack.c.h.b16 %v1155
    %v1307 = vunpack.c.l.b16 %v1156
    %v1308 = vunpack.c.h.b16 %v1156
    %v1309 = vunpack.c.l.b16 %v1157
    %v1310 = vunpack.c.h.b16 %v1157
    %v1311 = vunpack.c.l.b16 %v1158
    %v1312 = vunpack.c.h.b16 %v1158
    %v1313 = vunpack.c.l.b16 %v1159
    %v1314 = vunpack.c.h.b16 %v1159
    %v1315 = vunpack.c.l.b16 %v1160
    %v1316 = vunpack.c.h.b16 %v1160
    %v1317 = vpack.c.b16 %v1223, %v1221
    %v1318 = vpack.c.b16 %v1224, %v1222
    %v1319 = vpack.c.b16 %v1227, %v1225
    %v1320 = vpack.c.b16 %v1228, %v1226
    %v1321 = vpack.c.b16 %v1231, %v1229
    %v1322 = vpack.c.b16 %v1232, %v1230
    %v1323 = vpack.c.b16 %v1235, %v1233
    %v1324 = vpack.c.b16 %v1236, %v1234
    %v1325 = vpack.c.b16 %v1239, %v1237
    %v1326 = vpack.c.b16 %v1240, %v1238
    %v1327 = vpack.c.b16 %v1243, %v1241
    %v1328 = vpack.c.b16 %v1244, %v1242
    %v1329 = vpack.c.b16 %v1247, %v1245
    %v1330 = vpack.c.b16 %v1248, %v1246
    %v1331 = vpack.c.b16 %v1251, %v1249
    %v1332 = vpack.c.b16 %v1252, %v1250
    %v1333 = vpack.c.b16 %v1255, %v1253
    %v1334 = vpack.c.b16 %v1256, %v1254
    %v1335 = vpack.c.b16 %v1259, %v1257
    %v1336 = vpack.c.b16 %v1260, %v1258
    %v1337 = vpack.c.b16 %v1263, %v1261
    %v1338 = vpack.c.b16 %v1264, %v1262
    %v1339 = vpack.c.b16 %v1267, %v1265
    %v1340 = vpack.c.b16 %v1268, %v1266
    %v1341 = vpack.c.b16 %v1271, %v1269
    %v1342 = vpack.c.b16 %v1272, %v1270
    %v1343 = vpack.c.b16 %v1275, %v1273
    %v1344 = vpack.c.b16 %v1276, %v1274
    %v1345 = vpack.c.b16 %v1279, %v1277
    %v1346 = vpack.c.b16 %v1280, %v1278
    %v1347 = vpack.c.b16 %v1283, %v1281
    %v1348 = vpack.c.b16 %v1284, %v1282
    %v1349 = vpack.c.b16 %v1287, %v1285
    %v1350 = vpack.c.b16 %v1288, %v1286
    %v1351 = vpack.c.b16 %v1291, %v1289
    %v1352 = vpack.c.b16 %v1292, %v1290
    %v1353 = vpack.c.b16 %v1295, %v1293
    %v1354 = vpack.c.b16 %v1296, %v1294
    %v1355 = vpack.c.b16 %v1299, %v1297
    %v1356 = vpack.c.b16 %v1300, %v1298
    %v1357 = vpack.c.b16 %v1303, %v1301
    %v1358 = vpack.c.b16 %v1304, %v1302
    %v1359 = vpack.c.b16 %v1307, %v1305
    %v1360 = vpack.c.b16 %v1308, %v1306
    %v1361 = vpack.c.b16 %v1311, %v1309
    %v1362 = vpack.c.b16 %v1312, %v1310
    %v1363 = vpack.c.b16 %v1315, %v1313
    %v1364 = vpack.c.b16 %v1316, %v1314
    %1413 = vmatprep.subr.bf16.mxu0 %v1318
    %1414 = vmatpush1.bf16.msra.mxu0 %v1317
    %1415 = vmatprep.subr.bf16.mxu0 %v1320
    %1416 = vmatpush1.bf16.msra.mxu0 %v1319
    %1417 = vmatprep.subr.bf16.mxu0 %v1322
    %1418 = vmatpush1.bf16.msra.mxu0 %v1321
    %1419 = vmatprep.subr.bf16.mxu0 %v1324
    %1420 = vmatpush1.bf16.msra.mxu0 %v1323
    %1421 = vmatprep.subr.bf16.mxu0 %v1326
    %1422 = vmatpush1.bf16.msra.mxu0 %v1325
    %1423 = vmatprep.subr.bf16.mxu0 %v1328
    %1424 = vmatpush1.bf16.msra.mxu0 %v1327
    %1425 = vmatprep.subr.bf16.mxu0 %v1330
    %1426 = vmatpush1.bf16.msra.mxu0 %v1329
    %1427 = vmatprep.subr.bf16.mxu0 %v1332
    %1428 = vmatpush1.bf16.msra.mxu0 %v1331
    %1429 = vmatprep.subr.bf16.mxu0 %v1334
    %1430 = vmatpush1.bf16.msra.mxu0 %v1333
    %1431 = vmatprep.subr.bf16.mxu0 %v1336
    %1432 = vmatpush1.bf16.msra.mxu0 %v1335
    %1433 = vmatprep.subr.bf16.mxu0 %v1338
    %1434 = vmatpush1.bf16.msra.mxu0 %v1337
    %1435 = vmatprep.subr.bf16.mxu0 %v1340
    %1436 = vmatpush1.bf16.msra.mxu0 %v1339
    %1437 = vmatprep.subr.bf16.mxu0 %v1342
    %1438 = vmatpush1.bf16.msra.mxu0 %v1341
    %1439 = vmatprep.subr.bf16.mxu0 %v1344
    %1440 = vmatpush1.bf16.msra.mxu0 %v1343
    %1441 = vmatprep.subr.bf16.mxu0 %v1346
    %1442 = vmatpush1.bf16.msra.mxu0 %v1345
    %1443 = vmatprep.subr.bf16.mxu0 %v1348
    %1444 = vmatpush1.bf16.msra.mxu0 %v1347
    %1445 = vmatprep.mubr.bf16.mxu0 %v1111
    %1446 = vmatmul.mubr.bf16.gmra.mrb[0].mxu0 %v1110
    %v1447 = vpop.f32.mrb[0].mxu0
    %v1448 = vadd.f32 %v1166, %v1447
    %v1449 = vpop.f32.mrb[0].mxu0
    %v1450 = vadd.f32 %v1170, %v1449
    %v1451 = vpop.f32.mrb[0].mxu0
    %v1452 = vpop.f32.mrb[0].mxu0
    %1453 = vdwg.mxu0
    %1454 = vmatprep.subr.bf16.mxu0 %v1350
    %1455 = vmatpush1.bf16.msra.mxu0 %v1349
    %1456 = vmatprep.subr.bf16.mxu0 %v1352
    %1457 = vmatpush1.bf16.msra.mxu0 %v1351
    %1458 = vmatprep.subr.bf16.mxu0 %v1354
    %1459 = vmatpush1.bf16.msra.mxu0 %v1353
    %1460 = vmatprep.subr.bf16.mxu0 %v1356
    %1461 = vmatpush1.bf16.msra.mxu0 %v1355
    %1462 = vmatprep.subr.bf16.mxu0 %v1358
    %1463 = vmatpush1.bf16.msra.mxu0 %v1357
    %1464 = vmatprep.subr.bf16.mxu0 %v1360
    %1465 = vmatpush1.bf16.msra.mxu0 %v1359
    %1466 = vmatprep.subr.bf16.mxu0 %v1362
    %1467 = vmatpush1.bf16.msra.mxu0 %v1361
    %1468 = vmatprep.subr.bf16.mxu0 %v1364
    %1469 = vmatpush1.bf16.msra.mxu0 %v1363
    %1470 = vmatprep.subr.bf16.mxu0 0
    %1471 = vmatpush1.bf16.msra.mxu0 0
    %1472 = vmatprep.subr.bf16.mxu0 0
    %1473 = vmatpush1.bf16.msra.mxu0 0
    %1474 = vmatprep.subr.bf16.mxu0 0
    %1475 = vmatpush1.bf16.msra.mxu0 0
    %1476 = vmatprep.subr.bf16.mxu0 0
    %1477 = vmatpush1.bf16.msra.mxu0 0
    %1478 = vmatprep.subr.bf16.mxu0 0
    %1479 = vmatpush1.bf16.msra.mxu0 0
    %1480 = vmatprep.subr.bf16.mxu0 0
    %1481 = vmatpush1.bf16.msra.mxu0 0
    %1482 = vmatprep.subr.bf16.mxu0 0
    %1483 = vmatpush1.bf16.msra.mxu0 0
    %1484 = vmatprep.subr.bf16.mxu0 0
    %1485 = vmatpush1.bf16.msra.mxu0 0
    %1486 = vmatprep.mubr.bf16.mxu0 0
    %1487 = vmatmul.mubr.bf16.gmra.mrb[0].mxu0 %v1112
    %v1488 = vpop.f32.mrb[0].mxu0
    %v1489 = vadd.f32 %v1448, %v1488
    %v1490 = vpop.f32.mrb[0].mxu0
    %v1491 = vadd.f32 %v1450, %v1490
    %v1492 = vpop.f32.mrb[0].mxu0
    %v1493 = vpop.f32.mrb[0].mxu0
    %1494 = vdwg.mxu0
    %v1495 = vmul.f32 %v1489, 0.2
    %v1496 = vmul.f32 %v1491, 0.2
    %v1497 = vmax.f32 %v1489, %v1495
    %v1498 = vmax.f32 %v1491, %v1496
    %v1499 = vpack.c.bf16 %v1497, %v1497
    %v1500 = vpack.c.bf16 %v1498, %v1498
    %v1501 = vld [vmem:[#allocation2 + $0x14] sm:$0xf]
    %v1502 = vld [vmem:[#allocation2 + $0x44] sm:$0xf]
    %v1503 = vld [vmem:[#allocation2 + $0x74] sm:$0xf]
    %v1504 = vld [vmem:[#allocation2 + $0xa4] sm:$0xf]
    %v1505 = vld [vmem:[#allocation2 + $0xd4] sm:$0xf]
    %v1506 = vld [vmem:[#allocation2 + $0x104] sm:$0xf]
    %v1507 = vld [vmem:[#allocation2 + $0x134] sm:$0xf]
    %v1508 = vld [vmem:[#allocation2 + $0x164] sm:$0xf]
    %v1509 = vld [vmem:[#allocation2 + $0x194] sm:$0xf]
    %v1510 = vld [vmem:[#allocation2 + $0x1c4] sm:$0xf]
    %v1511 = vld [vmem:[#allocation2 + $0x1f4] sm:$0xf]
    %v1512 = vld [vmem:[#allocation2 + $0x224] sm:$0xf]
    %v1513 = vld [vmem:[#allocation2 + $0x254] sm:$0xf]
    %v1514 = vld [vmem:[#allocation2 + $0x284] sm:$0xf]
    %v1515 = vld [vmem:[#allocation2 + $0x2b4] sm:$0xf]
    %v1516 = vld [vmem:[#allocation2 + $0x2e4] sm:$0xf]
    %v1517 = vld [vmem:[#allocation2 + $0x314] sm:$0xf]
    %v1518 = vld [vmem:[#allocation2 + $0x344] sm:$0xf]
    %v1519 = vld [vmem:[#allocation2 + $0x374] sm:$0xf]
    %v1520 = vld [vmem:[#allocation2 + $0x3a4] sm:$0xf]
    %v1521 = vld [vmem:[#allocation2 + $0x3d4] sm:$0xf]
    %v1522 = vld [vmem:[#allocation2 + $0x404] sm:$0xf]
    %v1523 = vld [vmem:[#allocation2 + $0x434] sm:$0xf]
    %v1524 = vld [vmem:[#allocation2 + $0x464] sm:$0xf]
    %v1525 = vld [vmem:[#allocation2 + $0x494] sm:$0xf]
    %v1526 = vld [vmem:[#allocation2 + $0x4c4] sm:$0xf]
    %v1527 = vld [vmem:[#allocation2 + $0x4f4] sm:$0xf]
    %v1528 = vld [vmem:[#allocation2 + $0x524] sm:$0xf]
    %v1529 = vld [vmem:[#allocation2 + $0x554] sm:$0xf]
    %v1530 = vld [vmem:[#allocation2 + $0x584] sm:$0xf]
    %v1531 = vld [vmem:[#allocation2 + $0x5b4] sm:$0xf]
    %v1532 = vld [vmem:[#allocation2 + $0x5e4] sm:$0xf]
    %v1533 = vld [vmem:[#allocation4 + $0x5] sm:$0x1]
    %v1535 = vlaneseq
    %v1536 = vshrl.u32 %v1535, 7
    %v1537 = vsub.s32 0, %v1536
    %v1538 = vrot.slane %v1533, %v1537
    %v1572 = vunpack.c.l.b16 %v1501
    %v1573 = vunpack.c.l.b16 %v1502
    %v1574 = vunpack.c.l.b16 %v1503
    %v1575 = vunpack.c.l.b16 %v1504
    %v1576 = vunpack.c.l.b16 %v1505
    %v1577 = vunpack.c.l.b16 %v1506
    %v1578 = vunpack.c.l.b16 %v1507
    %v1579 = vunpack.c.l.b16 %v1508
    %v1580 = vunpack.c.l.b16 %v1509
    %v1581 = vunpack.c.l.b16 %v1510
    %v1582 = vunpack.c.l.b16 %v1511
    %v1583 = vunpack.c.l.b16 %v1512
    %v1584 = vunpack.c.l.b16 %v1513
    %v1585 = vunpack.c.l.b16 %v1514
    %v1586 = vunpack.c.l.b16 %v1515
    %v1587 = vunpack.c.l.b16 %v1516
    %v1588 = vunpack.c.l.b16 %v1517
    %v1589 = vunpack.c.l.b16 %v1518
    %v1590 = vunpack.c.l.b16 %v1519
    %v1591 = vunpack.c.l.b16 %v1520
    %v1592 = vunpack.c.l.b16 %v1521
    %v1593 = vunpack.c.l.b16 %v1522
    %v1594 = vunpack.c.l.b16 %v1523
    %v1595 = vunpack.c.l.b16 %v1524
    %v1596 = vunpack.c.l.b16 %v1525
    %v1597 = vunpack.c.l.b16 %v1526
    %v1598 = vunpack.c.l.b16 %v1527
    %v1599 = vunpack.c.l.b16 %v1528
    %v1600 = vunpack.c.l.b16 %v1529
    %v1601 = vunpack.c.l.b16 %v1530
    %v1602 = vunpack.c.l.b16 %v1531
    %v1603 = vunpack.c.l.b16 %v1532
    %v1604 = vpack.c.b16 %v1573, %v1572
    %v1605 = vpack.c.b16 %v1575, %v1574
    %v1606 = vpack.c.b16 %v1577, %v1576
    %v1607 = vpack.c.b16 %v1579, %v1578
    %v1608 = vpack.c.b16 %v1581, %v1580
    %v1609 = vpack.c.b16 %v1583, %v1582
    %v1610 = vpack.c.b16 %v1585, %v1584
    %v1611 = vpack.c.b16 %v1587, %v1586
    %v1612 = vpack.c.b16 %v1589, %v1588
    %v1613 = vpack.c.b16 %v1591, %v1590
    %v1614 = vpack.c.b16 %v1593, %v1592
    %v1615 = vpack.c.b16 %v1595, %v1594
    %v1616 = vpack.c.b16 %v1597, %v1596
    %v1617 = vpack.c.b16 %v1599, %v1598
    %v1618 = vpack.c.b16 %v1601, %v1600
    %v1619 = vpack.c.b16 %v1603, %v1602
    %1636 = vmatprep.subr.bf16.mxu0 0
    %1637 = vmatpush1.bf16.msra.mxu0 %v1604
    %1638 = vmatprep.subr.bf16.mxu0 0
    %1639 = vmatpush1.bf16.msra.mxu0 %v1605
    %1640 = vmatprep.subr.bf16.mxu0 0
    %1641 = vmatpush1.bf16.msra.mxu0 %v1606
    %1642 = vmatprep.subr.bf16.mxu0 0
    %1643 = vmatpush1.bf16.msra.mxu0 %v1607
    %1644 = vmatprep.subr.bf16.mxu0 0
    %1645 = vmatpush1.bf16.msra.mxu0 %v1608
    %1646 = vmatprep.subr.bf16.mxu0 0
    %1647 = vmatpush1.bf16.msra.mxu0 %v1609
    %1648 = vmatprep.subr.bf16.mxu0 0
    %1649 = vmatpush1.bf16.msra.mxu0 %v1610
    %1650 = vmatprep.subr.bf16.mxu0 0
    %1651 = vmatpush1.bf16.msra.mxu0 %v1611
    %1652 = vmatprep.subr.bf16.mxu0 0
    %1653 = vmatpush1.bf16.msra.mxu0 %v1612
    %1654 = vmatprep.subr.bf16.mxu0 0
    %1655 = vmatpush1.bf16.msra.mxu0 %v1613
    %1656 = vmatprep.subr.bf16.mxu0 0
    %1657 = vmatpush1.bf16.msra.mxu0 %v1614
    %1658 = vmatprep.subr.bf16.mxu0 0
    %1659 = vmatpush1.bf16.msra.mxu0 %v1615
    %1660 = vmatprep.subr.bf16.mxu0 0
    %1661 = vmatpush1.bf16.msra.mxu0 %v1616
    %1662 = vmatprep.subr.bf16.mxu0 0
    %1663 = vmatpush1.bf16.msra.mxu0 %v1617
    %1664 = vmatprep.subr.bf16.mxu0 0
    %1665 = vmatpush1.bf16.msra.mxu0 %v1618
    %1666 = vmatprep.subr.bf16.mxu0 0
    %1667 = vmatpush1.bf16.msra.mxu0 %v1619
    %1668 = vmatprep.mubr.bf16.mxu0 %v1500
    %1669 = vmatmul.mubr.bf16.gmra.mrb[0].mxu0 %v1499
    %v1670 = vpop.f32.mrb[0].mxu0
    %v1671 = vadd.f32 %v1538, %v1670
    %v1672 = vpop.f32.mrb[0].mxu0
    %v1673 = vpop.f32.mrb[0].mxu0
    %v1674 = vpop.f32.mrb[0].mxu0
    %1675 = vdwg.mxu0
    %v1676 = vmul.f32 %v1671, 0.2
    %v1677 = vmax.f32 %v1671, %v1676
    %v1678 = vpack.c.bf16 %v1677, %v1677
    %v1679 = vld [vmem:[#allocation2 + $0x18] sm:$0xf]
    %v1680 = vld [vmem:[#allocation2 + $0x48] sm:$0xf]
    %v1681 = vld [vmem:[#allocation2 + $0x78] sm:$0xf]
    %v1682 = vld [vmem:[#allocation2 + $0xa8] sm:$0xf]
    %v1683 = vld [vmem:[#allocation2 + $0xd8] sm:$0xf]
    %v1684 = vld [vmem:[#allocation2 + $0x108] sm:$0xf]
    %v1685 = vld [vmem:[#allocation2 + $0x138] sm:$0xf]
    %v1686 = vld [vmem:[#allocation2 + $0x168] sm:$0xf]
    %v1687 = vld [vmem:[#allocation2 + $0x198] sm:$0xf]
    %v1688 = vld [vmem:[#allocation2 + $0x1c8] sm:$0xf]
    %v1689 = vld [vmem:[#allocation2 + $0x1f8] sm:$0xf]
    %v1690 = vld [vmem:[#allocation2 + $0x228] sm:$0xf]
    %v1691 = vld [vmem:[#allocation2 + $0x258] sm:$0xf]
    %v1692 = vld [vmem:[#allocation2 + $0x288] sm:$0xf]
    %v1693 = vld [vmem:[#allocation2 + $0x2b8] sm:$0xf]
    %v1694 = vld [vmem:[#allocation2 + $0x2e8] sm:$0xf]
    %v1695 = vld [vmem:[#allocation4 + $0x6] sm:$0x1]
    %v1697 = vlaneseq
    %v1698 = vshrl.u32 %v1697, 7
    %v1699 = vsub.s32 0, %v1698
    %v1700 = vrot.slane %v1695, %v1699
    %v1718 = vunpack.c.l.b16 %v1679
    %v1719 = vunpack.c.l.b16 %v1680
    %v1720 = vunpack.c.l.b16 %v1681
    %v1721 = vunpack.c.l.b16 %v1682
    %v1722 = vunpack.c.l.b16 %v1683
    %v1723 = vunpack.c.l.b16 %v1684
    %v1724 = vunpack.c.l.b16 %v1685
    %v1725 = vunpack.c.l.b16 %v1686
    %v1726 = vunpack.c.l.b16 %v1687
    %v1727 = vunpack.c.l.b16 %v1688
    %v1728 = vunpack.c.l.b16 %v1689
    %v1729 = vunpack.c.l.b16 %v1690
    %v1730 = vunpack.c.l.b16 %v1691
    %v1731 = vunpack.c.l.b16 %v1692
    %v1732 = vunpack.c.l.b16 %v1693
    %v1733 = vunpack.c.l.b16 %v1694
    %v1734 = vpack.c.b16 %v1719, %v1718
    %v1735 = vpack.c.b16 %v1721, %v1720
    %v1736 = vpack.c.b16 %v1723, %v1722
    %v1737 = vpack.c.b16 %v1725, %v1724
    %v1738 = vpack.c.b16 %v1727, %v1726
    %v1739 = vpack.c.b16 %v1729, %v1728
    %v1740 = vpack.c.b16 %v1731, %v1730
    %v1741 = vpack.c.b16 %v1733, %v1732
    %1750 = vmatprep.subr.bf16.mxu0 0
    %1751 = vmatpush1.bf16.msra.mxu0 %v1734
    %1752 = vmatprep.subr.bf16.mxu0 0
    %1753 = vmatpush1.bf16.msra.mxu0 %v1735
    %1754 = vmatprep.subr.bf16.mxu0 0
    %1755 = vmatpush1.bf16.msra.mxu0 %v1736
    %1756 = vmatprep.subr.bf16.mxu0 0
    %1757 = vmatpush1.bf16.msra.mxu0 %v1737
    %1758 = vmatprep.subr.bf16.mxu0 0
    %1759 = vmatpush1.bf16.msra.mxu0 %v1738
    %1760 = vmatprep.subr.bf16.mxu0 0
    %1761 = vmatpush1.bf16.msra.mxu0 %v1739
    %1762 = vmatprep.subr.bf16.mxu0 0
    %1763 = vmatpush1.bf16.msra.mxu0 %v1740
    %1764 = vmatprep.subr.bf16.mxu0 0
    %1765 = vmatpush1.bf16.msra.mxu0 %v1741
    %1766 = vmatprep.subr.bf16.mxu0 0
    %1767 = vmatpush1.bf16.msra.mxu0 0
    %1768 = vmatprep.subr.bf16.mxu0 0
    %1769 = vmatpush1.bf16.msra.mxu0 0
    %1770 = vmatprep.subr.bf16.mxu0 0
    %1771 = vmatpush1.bf16.msra.mxu0 0
    %1772 = vmatprep.subr.bf16.mxu0 0
    %1773 = vmatpush1.bf16.msra.mxu0 0
    %1774 = vmatprep.subr.bf16.mxu0 0
    %1775 = vmatpush1.bf16.msra.mxu0 0
    %1776 = vmatprep.subr.bf16.mxu0 0
    %1777 = vmatpush1.bf16.msra.mxu0 0
    %1778 = vmatprep.subr.bf16.mxu0 0
    %1779 = vmatpush1.bf16.msra.mxu0 0
    %1780 = vmatprep.subr.bf16.mxu0 0
    %1781 = vmatpush1.bf16.msra.mxu0 0
    %1782 = vmatprep.mubr.bf16.mxu0 0
    %1783 = vmatmul.mubr.bf16.gmra.mrb[0].mxu0 %v1678
    %v1784 = vpop.f32.mrb[0].mxu0
    %v1785 = vadd.f32 %v1700, %v1784
    %v1786 = vpop.f32.mrb[0].mxu0
    %v1787 = vpop.f32.mrb[0].mxu0
    %v1788 = vpop.f32.mrb[0].mxu0
    %1789 = vdwg.mxu0
    %v1790 = vmul.f32 %v1785, 0.2
    %v1791 = vmax.f32 %v1785, %v1790
    %v1792 = vpack.c.bf16 %v1791, %v1791
    %v1793 = vld [vmem:[#allocation2 + $0x1c] sm:$0xff]
    %v1794 = vld [vmem:[#allocation2 + $0x24] sm:$0xff]
    %v1795 = vld [vmem:[#allocation2 + $0x4c] sm:$0xff]
    %v1796 = vld [vmem:[#allocation2 + $0x54] sm:$0xff]
    %v1797 = vld [vmem:[#allocation2 + $0x7c] sm:$0xff]
    %v1798 = vld [vmem:[#allocation2 + $0x84] sm:$0xff]
    %v1799 = vld [vmem:[#allocation2 + $0xac] sm:$0xff]
    %v1800 = vld [vmem:[#allocation2 + $0xb4] sm:$0xff]
    %v1801 = vld [vmem:[#allocation2 + $0xdc] sm:$0xff]
    %v1802 = vld [vmem:[#allocation2 + $0xe4] sm:$0xff]
    %v1803 = vld [vmem:[#allocation2 + $0x10c] sm:$0xff]
    %v1804 = vld [vmem:[#allocation2 + $0x114] sm:$0xff]
    %v1805 = vld [vmem:[#allocation2 + $0x13c] sm:$0xff]
    %v1806 = vld [vmem:[#allocation2 + $0x144] sm:$0xff]
    %v1807 = vld [vmem:[#allocation2 + $0x16c] sm:$0xff]
    %v1808 = vld [vmem:[#allocation2 + $0x174] sm:$0xff]
    %v1809 = vld [vmem:[#allocation2 + $0x19c] sm:$0xff]
    %v1810 = vld [vmem:[#allocation2 + $0x1a4] sm:$0xff]
    %v1811 = vld [vmem:[#allocation2 + $0x1cc] sm:$0xff]
    %v1812 = vld [vmem:[#allocation2 + $0x1d4] sm:$0xff]
    %v1813 = vld [vmem:[#allocation2 + $0x1fc] sm:$0xff]
    %v1814 = vld [vmem:[#allocation2 + $0x204] sm:$0xff]
    %v1815 = vld [vmem:[#allocation2 + $0x22c] sm:$0xff]
    %v1816 = vld [vmem:[#allocation2 + $0x234] sm:$0xff]
    %v1817 = vld [vmem:[#allocation2 + $0x25c] sm:$0xff]
    %v1818 = vld [vmem:[#allocation2 + $0x264] sm:$0xff]
    %v1819 = vld [vmem:[#allocation2 + $0x28c] sm:$0xff]
    %v1820 = vld [vmem:[#allocation2 + $0x294] sm:$0xff]
    %v1821 = vld [vmem:[#allocation2 + $0x2bc] sm:$0xff]
    %v1822 = vld [vmem:[#allocation2 + $0x2c4] sm:$0xff]
    %v1823 = vld [vmem:[#allocation2 + $0x2ec] sm:$0xff]
    %v1824 = vld [vmem:[#allocation2 + $0x2f4] sm:$0xff]
    %v1825 = vld [vmem:[#allocation4 + $0x7] sm:$0xf]
    %v1827 = vlaneseq
    %v1828 = vshrl.u32 %v1827, 7
    %v1829 = vsub.s32 0, %v1828
    %v1830 = vrot.slane %v1825, %v1829
    %v1831 = vlaneseq
    %v1832 = vshrl.u32 %v1831, 7
    %v1833 = vsub.s32 1, %v1832
    %v1834 = vrot.slane %v1825, %v1833
    %v1835 = vlaneseq
    %v1836 = vshrl.u32 %v1835, 7
    %v1837 = vsub.s32 2, %v1836
    %v1838 = vrot.slane %v1825, %v1837
    %v1839 = vlaneseq
    %v1840 = vshrl.u32 %v1839, 7
    %v1841 = vsub.s32 3, %v1840
    %v1842 = vrot.slane %v1825, %v1841
    %v1879 = vunpack.c.l.b16 %v1793
    %v1880 = vunpack.c.h.b16 %v1793
    %v1881 = vunpack.c.l.b16 %v1794
    %v1882 = vunpack.c.h.b16 %v1794
    %v1883 = vunpack.c.l.b16 %v1795
    %v1884 = vunpack.c.h.b16 %v1795
    %v1885 = vunpack.c.l.b16 %v1796
    %v1886 = vunpack.c.h.b16 %v1796
    %v1887 = vunpack.c.l.b16 %v1797
    %v1888 = vunpack.c.h.b16 %v1797
    %v1889 = vunpack.c.l.b16 %v1798
    %v1890 = vunpack.c.h.b16 %v1798
    %v1891 = vunpack.c.l.b16 %v1799
    %v1892 = vunpack.c.h.b16 %v1799
    %v1893 = vunpack.c.l.b16 %v1800
    %v1894 = vunpack.c.h.b16 %v1800
    %v1895 = vunpack.c.l.b16 %v1801
    %v1896 = vunpack.c.h.b16 %v1801
    %v1897 = vunpack.c.l.b16 %v1802
    %v1898 = vunpack.c.h.b16 %v1802
    %v1899 = vunpack.c.l.b16 %v1803
    %v1900 = vunpack.c.h.b16 %v1803
    %v1901 = vunpack.c.l.b16 %v1804
    %v1902 = vunpack.c.h.b16 %v1804
    %v1903 = vunpack.c.l.b16 %v1805
    %v1904 = vunpack.c.h.b16 %v1805
    %v1905 = vunpack.c.l.b16 %v1806
    %v1906 = vunpack.c.h.b16 %v1806
    %v1907 = vunpack.c.l.b16 %v1807
    %v1908 = vunpack.c.h.b16 %v1807
    %v1909 = vunpack.c.l.b16 %v1808
    %v1910 = vunpack.c.h.b16 %v1808
    %v1911 = vunpack.c.l.b16 %v1809
    %v1912 = vunpack.c.h.b16 %v1809
    %v1913 = vunpack.c.l.b16 %v1810
    %v1914 = vunpack.c.h.b16 %v1810
    %v1915 = vunpack.c.l.b16 %v1811
    %v1916 = vunpack.c.h.b16 %v1811
    %v1917 = vunpack.c.l.b16 %v1812
    %v1918 = vunpack.c.h.b16 %v1812
    %v1919 = vunpack.c.l.b16 %v1813
    %v1920 = vunpack.c.h.b16 %v1813
    %v1921 = vunpack.c.l.b16 %v1814
    %v1922 = vunpack.c.h.b16 %v1814
    %v1923 = vunpack.c.l.b16 %v1815
    %v1924 = vunpack.c.h.b16 %v1815
    %v1925 = vunpack.c.l.b16 %v1816
    %v1926 = vunpack.c.h.b16 %v1816
    %v1927 = vunpack.c.l.b16 %v1817
    %v1928 = vunpack.c.h.b16 %v1817
    %v1929 = vunpack.c.l.b16 %v1818
    %v1930 = vunpack.c.h.b16 %v1818
    %v1931 = vunpack.c.l.b16 %v1819
    %v1932 = vunpack.c.h.b16 %v1819
    %v1933 = vunpack.c.l.b16 %v1820
    %v1934 = vunpack.c.h.b16 %v1820
    %v1935 = vunpack.c.l.b16 %v1821
    %v1936 = vunpack.c.h.b16 %v1821
    %v1937 = vunpack.c.l.b16 %v1822
    %v1938 = vunpack.c.h.b16 %v1822
    %v1939 = vunpack.c.l.b16 %v1823
    %v1940 = vunpack.c.h.b16 %v1823
    %v1941 = vunpack.c.l.b16 %v1824
    %v1942 = vunpack.c.h.b16 %v1824
    %v1943 = vpack.c.b16 %v1883, %v1879
    %v1944 = vpack.c.b16 %v1884, %v1880
    %v1945 = vpack.c.b16 %v1885, %v1881
    %v1946 = vpack.c.b16 %v1886, %v1882
    %v1947 = vpack.c.b16 %v1891, %v1887
    %v1948 = vpack.c.b16 %v1892, %v1888
    %v1949 = vpack.c.b16 %v1893, %v1889
    %v1950 = vpack.c.b16 %v1894, %v1890
    %v1951 = vpack.c.b16 %v1899, %v1895
    %v1952 = vpack.c.b16 %v1900, %v1896
    %v1953 = vpack.c.b16 %v1901, %v1897
    %v1954 = vpack.c.b16 %v1902, %v1898
    %v1955 = vpack.c.b16 %v1907, %v1903
    %v1956 = vpack.c.b16 %v1908, %v1904
    %v1957 = vpack.c.b16 %v1909, %v1905
    %v1958 = vpack.c.b16 %v1910, %v1906
    %v1959 = vpack.c.b16 %v1915, %v1911
    %v1960 = vpack.c.b16 %v1916, %v1912
    %v1961 = vpack.c.b16 %v1917, %v1913
    %v1962 = vpack.c.b16 %v1918, %v1914
    %v1963 = vpack.c.b16 %v1923, %v1919
    %v1964 = vpack.c.b16 %v1924, %v1920
    %v1965 = vpack.c.b16 %v1925, %v1921
    %v1966 = vpack.c.b16 %v1926, %v1922
    %v1967 = vpack.c.b16 %v1931, %v1927
    %v1968 = vpack.c.b16 %v1932, %v1928
    %v1969 = vpack.c.b16 %v1933, %v1929
    %v1970 = vpack.c.b16 %v1934, %v1930
    %v1971 = vpack.c.b16 %v1939, %v1935
    %v1972 = vpack.c.b16 %v1940, %v1936
    %v1973 = vpack.c.b16 %v1941, %v1937
    %v1974 = vpack.c.b16 %v1942, %v1938
    %2007 = vmatprep.subr.bf16.mxu0 %v1944
    %2008 = vmatpush1.bf16.msra.mxu0 %v1943
    %2009 = vmatprep.subr.bf16.mxu0 %v1948
    %2010 = vmatpush1.bf16.msra.mxu0 %v1947
    %2011 = vmatprep.subr.bf16.mxu0 %v1952
    %2012 = vmatpush1.bf16.msra.mxu0 %v1951
    %2013 = vmatprep.subr.bf16.mxu0 %v1956
    %2014 = vmatpush1.bf16.msra.mxu0 %v1955
    %2015 = vmatprep.subr.bf16.mxu0 %v1960
    %2016 = vmatpush1.bf16.msra.mxu0 %v1959
    %2017 = vmatprep.subr.bf16.mxu0 %v1964
    %2018 = vmatpush1.bf16.msra.mxu0 %v1963
    %2019 = vmatprep.subr.bf16.mxu0 %v1968
    %2020 = vmatpush1.bf16.msra.mxu0 %v1967
    %2021 = vmatprep.subr.bf16.mxu0 %v1972
    %2022 = vmatpush1.bf16.msra.mxu0 %v1971
    %2023 = vmatprep.subr.bf16.mxu0 0
    %2024 = vmatpush1.bf16.msra.mxu0 0
    %2025 = vmatprep.subr.bf16.mxu0 0
    %2026 = vmatpush1.bf16.msra.mxu0 0
    %2027 = vmatprep.subr.bf16.mxu0 0
    %2028 = vmatpush1.bf16.msra.mxu0 0
    %2029 = vmatprep.subr.bf16.mxu0 0
    %2030 = vmatpush1.bf16.msra.mxu0 0
    %2031 = vmatprep.subr.bf16.mxu0 0
    %2032 = vmatpush1.bf16.msra.mxu0 0
    %2033 = vmatprep.subr.bf16.mxu0 0
    %2034 = vmatpush1.bf16.msra.mxu0 0
    %2035 = vmatprep.subr.bf16.mxu0 0
    %2036 = vmatpush1.bf16.msra.mxu0 0
    %2037 = vmatprep.subr.bf16.mxu0 0
    %2038 = vmatpush1.bf16.msra.mxu0 0
    %2039 = vmatprep.mubr.bf16.mxu0 0
    %2040 = vmatmul.mubr.bf16.gmra.mrb[0].mxu0 %v1792
    %v2041 = vpop.f32.mrb[0].mxu0
    %v2042 = vadd.f32 %v1830, %v2041
    %v2043 = vpop.f32.mrb[0].mxu0
    %v2044 = vadd.f32 %v1834, %v2043
    %v2045 = vpop.f32.mrb[0].mxu0
    %v2046 = vpop.f32.mrb[0].mxu0
    %2047 = vdwg.mxu0
    %2048 = vmatprep.subr.bf16.mxu0 %v1946
    %2049 = vmatpush1.bf16.msra.mxu0 %v1945
    %2050 = vmatprep.subr.bf16.mxu0 %v1950
    %2051 = vmatpush1.bf16.msra.mxu0 %v1949
    %2052 = vmatprep.subr.bf16.mxu0 %v1954
    %2053 = vmatpush1.bf16.msra.mxu0 %v1953
    %2054 = vmatprep.subr.bf16.mxu0 %v1958
    %2055 = vmatpush1.bf16.msra.mxu0 %v1957
    %2056 = vmatprep.subr.bf16.mxu0 %v1962
    %2057 = vmatpush1.bf16.msra.mxu0 %v1961
    %2058 = vmatprep.subr.bf16.mxu0 %v1966
    %2059 = vmatpush1.bf16.msra.mxu0 %v1965
    %2060 = vmatprep.subr.bf16.mxu0 %v1970
    %2061 = vmatpush1.bf16.msra.mxu0 %v1969
    %2062 = vmatprep.subr.bf16.mxu0 %v1974
    %2063 = vmatpush1.bf16.msra.mxu0 %v1973
    %2064 = vmatprep.subr.bf16.mxu0 0
    %2065 = vmatpush1.bf16.msra.mxu0 0
    %2066 = vmatprep.subr.bf16.mxu0 0
    %2067 = vmatpush1.bf16.msra.mxu0 0
    %2068 = vmatprep.subr.bf16.mxu0 0
    %2069 = vmatpush1.bf16.msra.mxu0 0
    %2070 = vmatprep.subr.bf16.mxu0 0
    %2071 = vmatpush1.bf16.msra.mxu0 0
    %2072 = vmatprep.subr.bf16.mxu0 0
    %2073 = vmatpush1.bf16.msra.mxu0 0
    %2074 = vmatprep.subr.bf16.mxu0 0
    %2075 = vmatpush1.bf16.msra.mxu0 0
    %2076 = vmatprep.subr.bf16.mxu0 0
    %2077 = vmatpush1.bf16.msra.mxu0 0
    %2078 = vmatprep.subr.bf16.mxu0 0
    %2079 = vmatpush1.bf16.msra.mxu0 0
    %2080 = vmatprep.mubr.bf16.mxu0 0
    %2081 = vmatmul.mubr.bf16.gmra.mrb[0].mxu0 %v1792
    %v2082 = vpop.f32.mrb[0].mxu0
    %v2083 = vadd.f32 %v1838, %v2082
    %v2084 = vpop.f32.mrb[0].mxu0
    %v2085 = vadd.f32 %v1842, %v2084
    %v2086 = vpop.f32.mrb[0].mxu0
    %v2087 = vpop.f32.mrb[0].mxu0
    %2088 = vdwg.mxu0
    %v2089 = vmul.f32 %v2042, 0.01
    %v2090 = vmul.f32 %v2044, 0.01
    %v2091 = vmul.f32 %v2083, 0.01
    %v2092 = vmul.f32 %v2085, 0.01
    %v2093 = vmax.f32 %v2042, %v2089
    %v2094 = vmax.f32 %v2044, %v2090
    %v2095 = vmax.f32 %v2083, %v2091
    %v2096 = vmax.f32 %v2085, %v2092
    %v2097 = vpack.c.bf16 %v2093, %v2093
    %v2098 = vpack.c.bf16 %v2094, %v2094
    %v2099 = vpack.c.bf16 %v2095, %v2095
    %v2100 = vpack.c.bf16 %v2096, %v2096
    %v2101 = vld [vmem:[#allocation2 + $0x2c] sm:$0xf]
    %v2102 = vld [vmem:[#allocation2 + $0x5c] sm:$0xf]
    %v2103 = vld [vmem:[#allocation2 + $0x8c] sm:$0xf]
    %v2104 = vld [vmem:[#allocation2 + $0xbc] sm:$0xf]
    %v2105 = vld [vmem:[#allocation2 + $0xec] sm:$0xf]
    %v2106 = vld [vmem:[#allocation2 + $0x11c] sm:$0xf]
    %v2107 = vld [vmem:[#allocation2 + $0x14c] sm:$0xf]
    %v2108 = vld [vmem:[#allocation2 + $0x17c] sm:$0xf]
    %v2109 = vld [vmem:[#allocation2 + $0x1ac] sm:$0xf]
    %v2110 = vld [vmem:[#allocation2 + $0x1dc] sm:$0xf]
    %v2111 = vld [vmem:[#allocation2 + $0x20c] sm:$0xf]
    %v2112 = vld [vmem:[#allocation2 + $0x23c] sm:$0xf]
    %v2113 = vld [vmem:[#allocation2 + $0x26c] sm:$0xf]
    %v2114 = vld [vmem:[#allocation2 + $0x29c] sm:$0xf]
    %v2115 = vld [vmem:[#allocation2 + $0x2cc] sm:$0xf]
    %v2116 = vld [vmem:[#allocation2 + $0x2fc] sm:$0xf]
    %v2117 = vld [vmem:[#allocation2 + $0x32c] sm:$0xf]
    %v2118 = vld [vmem:[#allocation2 + $0x35c] sm:$0xf]
    %v2119 = vld [vmem:[#allocation2 + $0x38c] sm:$0xf]
    %v2120 = vld [vmem:[#allocation2 + $0x3bc] sm:$0xf]
    %v2121 = vld [vmem:[#allocation2 + $0x3ec] sm:$0xf]
    %v2122 = vld [vmem:[#allocation2 + $0x41c] sm:$0xf]
    %v2123 = vld [vmem:[#allocation2 + $0x44c] sm:$0xf]
    %v2124 = vld [vmem:[#allocation2 + $0x47c] sm:$0xf]
    %v2125 = vld [vmem:[#allocation2 + $0x4ac] sm:$0xf]
    %v2126 = vld [vmem:[#allocation2 + $0x4dc] sm:$0xf]
    %v2127 = vld [vmem:[#allocation2 + $0x50c] sm:$0xf]
    %v2128 = vld [vmem:[#allocation2 + $0x53c] sm:$0xf]
    %v2129 = vld [vmem:[#allocation2 + $0x56c] sm:$0xf]
    %v2130 = vld [vmem:[#allocation2 + $0x59c] sm:$0xf]
    %v2131 = vld [vmem:[#allocation2 + $0x5cc] sm:$0xf]
    %v2132 = vld [vmem:[#allocation2 + $0x5fc] sm:$0xf]
    %v2133 = vld [vmem:[#allocation2 + $0x62c] sm:$0xf]
    %v2134 = vld [vmem:[#allocation2 + $0x65c] sm:$0xf]
    %v2135 = vld [vmem:[#allocation2 + $0x68c] sm:$0xf]
    %v2136 = vld [vmem:[#allocation2 + $0x6bc] sm:$0xf]
    %v2137 = vld [vmem:[#allocation2 + $0x6ec] sm:$0xf]
    %v2138 = vld [vmem:[#allocation2 + $0x71c] sm:$0xf]
    %v2139 = vld [vmem:[#allocation2 + $0x74c] sm:$0xf]
    %v2140 = vld [vmem:[#allocation2 + $0x77c] sm:$0xf]
    %v2141 = vld [vmem:[#allocation2 + $0x7ac] sm:$0xf]
    %v2142 = vld [vmem:[#allocation2 + $0x7dc] sm:$0xf]
    %v2143 = vld [vmem:[#allocation2 + $0x80c] sm:$0xf]
    %v2144 = vld [vmem:[#allocation2 + $0x83c] sm:$0xf]
    %v2145 = vld [vmem:[#allocation2 + $0x86c] sm:$0xf]
    %v2146 = vld [vmem:[#allocation2 + $0x89c] sm:$0xf]
    %v2147 = vld [vmem:[#allocation2 + $0x8cc] sm:$0xf]
    %v2148 = vld [vmem:[#allocation2 + $0x8fc] sm:$0xf]
    %v2149 = vld [vmem:[#allocation2 + $0x92c] sm:$0xf]
    %v2150 = vld [vmem:[#allocation2 + $0x95c] sm:$0xf]
    %v2151 = vld [vmem:[#allocation2 + $0x98c] sm:$0xf]
    %v2152 = vld [vmem:[#allocation2 + $0x9bc] sm:$0xf]
    %v2153 = vld [vmem:[#allocation2 + $0x9ec] sm:$0xf]
    %v2154 = vld [vmem:[#allocation2 + $0xa1c] sm:$0xf]
    %v2155 = vld [vmem:[#allocation2 + $0xa4c] sm:$0xf]
    %v2156 = vld [vmem:[#allocation2 + $0xa7c] sm:$0xf]
    %v2157 = vld [vmem:[#allocation2 + $0xaac] sm:$0xf]
    %v2158 = vld [vmem:[#allocation2 + $0xadc] sm:$0xf]
    %v2159 = vld [vmem:[#allocation2 + $0xb0c] sm:$0xf]
    %v2160 = vld [vmem:[#allocation2 + $0xb3c] sm:$0xf]
    %v2161 = vld [vmem:[#allocation2 + $0xb6c] sm:$0xf]
    %v2162 = vld [vmem:[#allocation2 + $0xb9c] sm:$0xf]
    %v2163 = vld [vmem:[#allocation2 + $0xbcc] sm:$0xf]
    %v2164 = vld [vmem:[#allocation2 + $0xbfc] sm:$0xf]
    %v2165 = vld [vmem:[#allocation4 + $0xb] sm:$0x1]
    %v2167 = vlaneseq
    %v2168 = vshrl.u32 %v2167, 7
    %v2169 = vsub.s32 0, %v2168
    %v2170 = vrot.slane %v2165, %v2169
    %v2236 = vunpack.c.l.b16 %v2101
    %v2237 = vunpack.c.l.b16 %v2102
    %v2238 = vunpack.c.l.b16 %v2103
    %v2239 = vunpack.c.l.b16 %v2104
    %v2240 = vunpack.c.l.b16 %v2105
    %v2241 = vunpack.c.l.b16 %v2106
    %v2242 = vunpack.c.l.b16 %v2107
    %v2243 = vunpack.c.l.b16 %v2108
    %v2244 = vunpack.c.l.b16 %v2109
    %v2245 = vunpack.c.l.b16 %v2110
    %v2246 = vunpack.c.l.b16 %v2111
    %v2247 = vunpack.c.l.b16 %v2112
    %v2248 = vunpack.c.l.b16 %v2113
    %v2249 = vunpack.c.l.b16 %v2114
    %v2250 = vunpack.c.l.b16 %v2115
    %v2251 = vunpack.c.l.b16 %v2116
    %v2252 = vunpack.c.l.b16 %v2117
    %v2253 = vunpack.c.l.b16 %v2118
    %v2254 = vunpack.c.l.b16 %v2119
    %v2255 = vunpack.c.l.b16 %v2120
    %v2256 = vunpack.c.l.b16 %v2121
    %v2257 = vunpack.c.l.b16 %v2122
    %v2258 = vunpack.c.l.b16 %v2123
    %v2259 = vunpack.c.l.b16 %v2124
    %v2260 = vunpack.c.l.b16 %v2125
    %v2261 = vunpack.c.l.b16 %v2126
    %v2262 = vunpack.c.l.b16 %v2127
    %v2263 = vunpack.c.l.b16 %v2128
    %v2264 = vunpack.c.l.b16 %v2129
    %v2265 = vunpack.c.l.b16 %v2130
    %v2266 = vunpack.c.l.b16 %v2131
    %v2267 = vunpack.c.l.b16 %v2132
    %v2268 = vunpack.c.l.b16 %v2133
    %v2269 = vunpack.c.l.b16 %v2134
    %v2270 = vunpack.c.l.b16 %v2135
    %v2271 = vunpack.c.l.b16 %v2136
    %v2272 = vunpack.c.l.b16 %v2137
    %v2273 = vunpack.c.l.b16 %v2138
    %v2274 = vunpack.c.l.b16 %v2139
    %v2275 = vunpack.c.l.b16 %v2140
    %v2276 = vunpack.c.l.b16 %v2141
    %v2277 = vunpack.c.l.b16 %v2142
    %v2278 = vunpack.c.l.b16 %v2143
    %v2279 = vunpack.c.l.b16 %v2144
    %v2280 = vunpack.c.l.b16 %v2145
    %v2281 = vunpack.c.l.b16 %v2146
    %v2282 = vunpack.c.l.b16 %v2147
    %v2283 = vunpack.c.l.b16 %v2148
    %v2284 = vunpack.c.l.b16 %v2149
    %v2285 = vunpack.c.l.b16 %v2150
    %v2286 = vunpack.c.l.b16 %v2151
    %v2287 = vunpack.c.l.b16 %v2152
    %v2288 = vunpack.c.l.b16 %v2153
    %v2289 = vunpack.c.l.b16 %v2154
    %v2290 = vunpack.c.l.b16 %v2155
    %v2291 = vunpack.c.l.b16 %v2156
    %v2292 = vunpack.c.l.b16 %v2157
    %v2293 = vunpack.c.l.b16 %v2158
    %v2294 = vunpack.c.l.b16 %v2159
    %v2295 = vunpack.c.l.b16 %v2160
    %v2296 = vunpack.c.l.b16 %v2161
    %v2297 = vunpack.c.l.b16 %v2162
    %v2298 = vunpack.c.l.b16 %v2163
    %v2299 = vunpack.c.l.b16 %v2164
    %v2300 = vpack.c.b16 %v2237, %v2236
    %v2301 = vpack.c.b16 %v2239, %v2238
    %v2302 = vpack.c.b16 %v2241, %v2240
    %v2303 = vpack.c.b16 %v2243, %v2242
    %v2304 = vpack.c.b16 %v2245, %v2244
    %v2305 = vpack.c.b16 %v2247, %v2246
    %v2306 = vpack.c.b16 %v2249, %v2248
    %v2307 = vpack.c.b16 %v2251, %v2250
    %v2308 = vpack.c.b16 %v2253, %v2252
    %v2309 = vpack.c.b16 %v2255, %v2254
    %v2310 = vpack.c.b16 %v2257, %v2256
    %v2311 = vpack.c.b16 %v2259, %v2258
    %v2312 = vpack.c.b16 %v2261, %v2260
    %v2313 = vpack.c.b16 %v2263, %v2262
    %v2314 = vpack.c.b16 %v2265, %v2264
    %v2315 = vpack.c.b16 %v2267, %v2266
    %v2316 = vpack.c.b16 %v2269, %v2268
    %v2317 = vpack.c.b16 %v2271, %v2270
    %v2318 = vpack.c.b16 %v2273, %v2272
    %v2319 = vpack.c.b16 %v2275, %v2274
    %v2320 = vpack.c.b16 %v2277, %v2276
    %v2321 = vpack.c.b16 %v2279, %v2278
    %v2322 = vpack.c.b16 %v2281, %v2280
    %v2323 = vpack.c.b16 %v2283, %v2282
    %v2324 = vpack.c.b16 %v2285, %v2284
    %v2325 = vpack.c.b16 %v2287, %v2286
    %v2326 = vpack.c.b16 %v2289, %v2288
    %v2327 = vpack.c.b16 %v2291, %v2290
    %v2328 = vpack.c.b16 %v2293, %v2292
    %v2329 = vpack.c.b16 %v2295, %v2294
    %v2330 = vpack.c.b16 %v2297, %v2296
    %v2331 = vpack.c.b16 %v2299, %v2298
    %2364 = vmatprep.subr.bf16.mxu0 0
    %2365 = vmatpush1.bf16.msra.mxu0 %v2300
    %2366 = vmatprep.subr.bf16.mxu0 0
    %2367 = vmatpush1.bf16.msra.mxu0 %v2301
    %2368 = vmatprep.subr.bf16.mxu0 0
    %2369 = vmatpush1.bf16.msra.mxu0 %v2302
    %2370 = vmatprep.subr.bf16.mxu0 0
    %2371 = vmatpush1.bf16.msra.mxu0 %v2303
    %2372 = vmatprep.subr.bf16.mxu0 0
    %2373 = vmatpush1.bf16.msra.mxu0 %v2304
    %2374 = vmatprep.subr.bf16.mxu0 0
    %2375 = vmatpush1.bf16.msra.mxu0 %v2305
    %2376 = vmatprep.subr.bf16.mxu0 0
    %2377 = vmatpush1.bf16.msra.mxu0 %v2306
    %2378 = vmatprep.subr.bf16.mxu0 0
    %2379 = vmatpush1.bf16.msra.mxu0 %v2307
    %2380 = vmatprep.subr.bf16.mxu0 0
    %2381 = vmatpush1.bf16.msra.mxu0 %v2308
    %2382 = vmatprep.subr.bf16.mxu0 0
    %2383 = vmatpush1.bf16.msra.mxu0 %v2309
    %2384 = vmatprep.subr.bf16.mxu0 0
    %2385 = vmatpush1.bf16.msra.mxu0 %v2310
    %2386 = vmatprep.subr.bf16.mxu0 0
    %2387 = vmatpush1.bf16.msra.mxu0 %v2311
    %2388 = vmatprep.subr.bf16.mxu0 0
    %2389 = vmatpush1.bf16.msra.mxu0 %v2312
    %2390 = vmatprep.subr.bf16.mxu0 0
    %2391 = vmatpush1.bf16.msra.mxu0 %v2313
    %2392 = vmatprep.subr.bf16.mxu0 0
    %2393 = vmatpush1.bf16.msra.mxu0 %v2314
    %2394 = vmatprep.subr.bf16.mxu0 0
    %2395 = vmatpush1.bf16.msra.mxu0 %v2315
    %2396 = vmatprep.mubr.bf16.mxu0 %v2098
    %2397 = vmatmul.mubr.bf16.gmra.mrb[0].mxu0 %v2097
    %v2398 = vpop.f32.mrb[0].mxu0
    %v2399 = vadd.f32 %v2170, %v2398
    %v2400 = vpop.f32.mrb[0].mxu0
    %v2401 = vpop.f32.mrb[0].mxu0
    %v2402 = vpop.f32.mrb[0].mxu0
    %2403 = vdwg.mxu0
    %2404 = vmatprep.subr.bf16.mxu0 0
    %2405 = vmatpush1.bf16.msra.mxu0 %v2316
    %2406 = vmatprep.subr.bf16.mxu0 0
    %2407 = vmatpush1.bf16.msra.mxu0 %v2317
    %2408 = vmatprep.subr.bf16.mxu0 0
    %2409 = vmatpush1.bf16.msra.mxu0 %v2318
    %2410 = vmatprep.subr.bf16.mxu0 0
    %2411 = vmatpush1.bf16.msra.mxu0 %v2319
    %2412 = vmatprep.subr.bf16.mxu0 0
    %2413 = vmatpush1.bf16.msra.mxu0 %v2320
    %2414 = vmatprep.subr.bf16.mxu0 0
    %2415 = vmatpush1.bf16.msra.mxu0 %v2321
    %2416 = vmatprep.subr.bf16.mxu0 0
    %2417 = vmatpush1.bf16.msra.mxu0 %v2322
    %2418 = vmatprep.subr.bf16.mxu0 0
    %2419 = vmatpush1.bf16.msra.mxu0 %v2323
    %2420 = vmatprep.subr.bf16.mxu0 0
    %2421 = vmatpush1.bf16.msra.mxu0 %v2324
    %2422 = vmatprep.subr.bf16.mxu0 0
    %2423 = vmatpush1.bf16.msra.mxu0 %v2325
    %2424 = vmatprep.subr.bf16.mxu0 0
    %2425 = vmatpush1.bf16.msra.mxu0 %v2326
    %2426 = vmatprep.subr.bf16.mxu0 0
    %2427 = vmatpush1.bf16.msra.mxu0 %v2327
    %2428 = vmatprep.subr.bf16.mxu0 0
    %2429 = vmatpush1.bf16.msra.mxu0 %v2328
    %2430 = vmatprep.subr.bf16.mxu0 0
    %2431 = vmatpush1.bf16.msra.mxu0 %v2329
    %2432 = vmatprep.subr.bf16.mxu0 0
    %2433 = vmatpush1.bf16.msra.mxu0 %v2330
    %2434 = vmatprep.subr.bf16.mxu0 0
    %2435 = vmatpush1.bf16.msra.mxu0 %v2331
    %2436 = vmatprep.mubr.bf16.mxu0 %v2100
    %2437 = vmatmul.mubr.bf16.gmra.mrb[0].mxu0 %v2099
    %v2438 = vpop.f32.mrb[0].mxu0
    %v2439 = vadd.f32 %v2399, %v2438
    %v2440 = vpop.f32.mrb[0].mxu0
    %v2441 = vpop.f32.mrb[0].mxu0
    %v2442 = vpop.f32.mrb[0].mxu0
    %2443 = vdwg.mxu0
    %v2444 = vmul.f32 %v2439, 0.01
    %v2445 = vmax.f32 %v2439, %v2444
    %v2446 = vpack.c.bf16 %v2445, %v2445
    %2447 = vst [vmem:[%s3] sm:$0xf] %v2446
    // Predicated region
    $region22: #{_forward_impl.1} parent=1 // pred_check
      _
    $region23: #{_forward_impl.1} parent=1 // pred_check_branch
      %2449 = sbr.rel (0) target = $region25
    $region24: #{_forward_impl.1} parent=1 // pred_region
      _
    $region25: #{_forward_impl.1} parent=1 // pred_fallthru
      _
    // Predicated region
    $region26: #{_forward_impl.1} parent=1 // pred_check
      _
    $region27: #{_forward_impl.1} parent=1 // pred_check_branch
      %2451 = sbr.rel (0) target = $region29
    $region28: #{_forward_impl.1} parent=1 // pred_region
      _
    $region29: #{_forward_impl.1} parent=1 // pred_fallthru
      _
    %2452 = vsyncpa [#allocation3], 1
    %2453 = vsyncpa [#allocation5], 1

</llo_original>
